<compile_context>
chip_gen: v7x
topology: tpu7x:2x2x1
jax: 0.10.0
libtpu: 0.0.40
codegen_flags: <defaults>
</compile_context>

<pallas_src>
import functools
import math

import jax
import jax.numpy as jnp
from jax.experimental import pallas as pl
from jax.experimental.pallas import tpu as pltpu


# ----------------------------------------------------------------------------
# Per-layer math (runs inside the Pallas kernel)
# ----------------------------------------------------------------------------
def _layer_norm(y, g, b):
    mu = jnp.mean(y, axis=-1, keepdims=True)
    var = jnp.mean((y - mu) ** 2, axis=-1, keepdims=True)
    return (y - mu) * jax.lax.rsqrt(var + 1e-5) * g + b


def _encoder_layer_core(x, bias, wq, bq, wk, bk, wv, bv, wo, bo,
                        g1, be1, w1, b1, w2, b2, g2, be2, n_heads):
    """x: (Bt,S,H) f32; bias: (Bt,1,S) additive key-pad bias -> (Bt,S,H) f32."""
    Bt, S, H = x.shape
    nh = n_heads
    hd = H // nh
    R = Bt * S
    inv_scale = 1.0 / math.sqrt(hd)

    x2 = x.reshape(R, H)
    xb = x2.astype(jnp.bfloat16)

    # Full-width QKV projections: one deep (K=H), wide (N=H) matmul each,
    # bf16 operands with f32 MXU accumulation.
    q = jnp.dot(xb, wq, preferred_element_type=jnp.float32) + bq
    k = jnp.dot(xb, wk, preferred_element_type=jnp.float32) + bk
    v = jnp.dot(xb, wv, preferred_element_type=jnp.float32) + bv

    # Cast to bf16 exactly ONCE; softmax / LN / residual math stays f32.
    q3 = q.astype(jnp.bfloat16).reshape(Bt, S, H)
    k3 = k.astype(jnp.bfloat16).reshape(Bt, S, H)
    v3 = v.astype(jnp.bfloat16).reshape(Bt, S, H)

    # Head-batched attention: fold heads into the single batch dimension of
    # the score/context einsums ((Bt,S,H) -> (nh*Bt, S, hd), head-major).
    def to_head_major(t):
        return jnp.concatenate(
            [t[:, :, h * hd:(h + 1) * hd] for h in range(nh)], axis=0)

    qm = to_head_major(q3)                            # (G, S, hd), G = nh*Bt
    km = to_head_major(k3)
    vm = to_head_major(v3)
    bias_g = jnp.concatenate([bias] * nh, axis=0)     # (G, 1, S)

    energy = jnp.einsum("bqd,bkd->bqk", qm, km,
                        preferred_element_type=jnp.float32) * inv_scale
    energy = energy + bias_g                          # broadcast over queries
    m = jnp.max(energy, axis=-1, keepdims=True)
    p = jnp.exp(energy - m)
    denom = jnp.sum(p, axis=-1, keepdims=True)
    attn = p * pl.reciprocal(denom, approx=True)      # EUP slot, frees the VALU
    ctx = jnp.einsum("bqk,bkd->bqd", attn.astype(jnp.bfloat16), vm,
                     preferred_element_type=jnp.float32)       # (G, S, hd)

    # Back to feature-major (R, H) with one concat, then ONE full-depth (K=H)
    # output projection (instead of n_heads MXU-starving K=hd matmuls).
    ctx_h = ctx.reshape(nh, R, hd)                    # leading regroup (cheap)
    ctx_cat = jnp.concatenate([ctx_h[h] for h in range(nh)], axis=-1)  # (R, H)
    sa = jnp.dot(ctx_cat.astype(jnp.bfloat16), wo,
                 preferred_element_type=jnp.float32) + bo

    # Residual + LN, FFN (bf16 matmuls, f32 accumulate), residual + LN.
    x1 = _layer_norm(x2 + sa, g1, be1)
    h1 = jnp.maximum(
        jnp.dot(x1.astype(jnp.bfloat16), w1,
                preferred_element_type=jnp.float32) + b1, 0.0)
    ff = jnp.dot(h1.astype(jnp.bfloat16), w2,
                 preferred_element_type=jnp.float32) + b2
    out = _layer_norm(x1 + ff, g2, be2)
    return out.reshape(Bt, S, H)


# ----------------------------------------------------------------------------
# Fused whole-encoder kernel: grid = (batch_blocks, n_layers)
# ----------------------------------------------------------------------------
def encoder_stack_kernel(tok_ref, pos_ref, mask_ref,
                         wq_ref, bq_ref, wk_ref, bk_ref, wv_ref, bv_ref,
                         wo_ref, bo_ref, g1_ref, be1_ref,
                         w1_ref, b1_ref, w2_ref, b2_ref, g2_ref, be2_ref,
                         out_ref, x_scr, *, n_heads, embed_scale):
    layer = pl.program_id(1)

    @pl.when(layer == 0)
    def _():
        # Fused embedding combine: tok * sqrt(H) + pos.
        # TODO(synk): dropout after the embedding is identity (eval mode).
        x_scr[...] = tok_ref[...] * embed_scale + pos_ref[...][None, :, :]

    # Additive key-padding bias, computed once per step (mask is exact 0/1).
    bias = jnp.where(mask_ref[...] == 0.0, jnp.float32(-1e10), jnp.float32(0.0))

    y = _encoder_layer_core(
        x_scr[...], bias,
        wq_ref[...], bq_ref[...], wk_ref[...], bk_ref[...],
        wv_ref[...], bv_ref[...], wo_ref[...], bo_ref[...],
        g1_ref[...], be1_ref[...], w1_ref[...], b1_ref[...],
        w2_ref[...], b2_ref[...], g2_ref[...], be2_ref[...],
        n_heads)

    # Activation stays resident in VMEM across the layer axis (no HBM trip).
    x_scr[...] = y

    @pl.when(layer == pl.num_programs(1) - 1)
    def _():
        # TODO(synk): for H < 128 a lane-dense (B, S*H) output slab would avoid
        # masked partial stores; skipped (minor-dim reshape in-kernel is risky).
        out_ref[...] = y.astype(out_ref.dtype)


# ----------------------------------------------------------------------------
# Wrapper: generation-aware blocking + pallas_call
# ----------------------------------------------------------------------------
_WEIGHT_KEYS = ("wq", "bq", "wk", "bk", "wv", "bv", "wo", "bo",
                "g1", "be1", "w1", "b1", "w2", "b2", "g2", "be2")


def _tpu_generation():
    kind = jax.devices()[0].device_kind.lower()
    for g in (7, 6, 5, 4):
        if f"v{g}" in kind or f"tpu{g}" in kind:
            return g
    return 0


def _vmem_limit_bytes(gen):
    if gen in (4, 5, 6):          # 128 MiB physical VMEM
        return 96 * 1024 * 1024
    if gen == 7:                  # 64 MiB physical VMEM -> keep the 32 MiB cap
        return 32 * 1024 * 1024
    return None                   # unknown backend: leave the default


def _largest_divisor_at_most(n, cap):
    best = 1
    for d in range(1, n + 1):
        if n % d == 0 and d <= cap:
            best = d
    return best


def encoder_forward(params, src, src_mask, hid_dim, n_heads):
    B, S = src.shape
    H = hid_dim
    # Embedding gather is plain-JAX glue; the scale+pos combine is fused into
    # the kernel's l==0 step.
    tok = jnp.take(params["tok_emb"], src, axis=0)        # (B, S, H) f32
    pos = params["pos_emb"][:S]                           # (S, H)
    scale = math.sqrt(H)

    n_layers = int(params["wq"].shape[0])
    if n_layers == 0:
        return tok * scale + pos[None]

    gen = _tpu_generation()
    # Feed >=128 rows (>=256 on v6e/v7x MXUs) into every matmul per grid step.
    row_target = 256 if gen >= 6 else 128
    cap = max(1, row_target // S)
    if gen >= 7 and B >= 2:
        # v7x has 2 TensorCores: keep >=2 parallel grid steps so both get work.
        cap = min(cap, B // 2)
    block_b = _largest_divisor_at_most(B, cap)
    grid = (B // block_b, n_layers)

    weight_args = tuple(params[k] for k in _WEIGHT_KEYS)

    def wspec(arr):
        # Weights stacked over layers: squeeze the layer dim, stream per layer
        # along the (arbitrary) layer grid axis; default double-buffering
        # prefetches the next layer's weights during the current layer.
        # TODO(synk): at realistic H/PF additionally tile w1/w2 over pf_dim
        # with an inner grid axis + VMEM accumulator (v7x VMEM budget).
        inner = tuple(arr.shape[1:])
        nzeros = (0,) * len(inner)
        return pl.BlockSpec((None,) + inner, lambda b, l: (l,) + nzeros)

    in_specs = ([pl.BlockSpec((block_b, S, H), lambda b, l: (b, 0, 0)),
                 pl.BlockSpec((S, H), lambda b, l: (0, 0)),
                 pl.BlockSpec((block_b, 1, S), lambda b, l: (b, 0, 0))]
                + [wspec(a) for a in weight_args])

    kernel = functools.partial(encoder_stack_kernel,
                               n_heads=n_heads, embed_scale=scale)

    return pl.pallas_call(
        kernel,
        out_shape=jax.ShapeDtypeStruct((B, S, H), jnp.float32),
        grid=grid,
        in_specs=in_specs,
        out_specs=pl.BlockSpec((block_b, S, H), lambda b, l: (b, 0, 0)),
        scratch_shapes=[pltpu.VMEM((block_b, S, H), jnp.float32)],
        compiler_params=pltpu.CompilerParams(
            dimension_semantics=("parallel", "arbitrary"),
            vmem_limit_bytes=_vmem_limit_bytes(gen)),
    )(tok, pos, src_mask, *weight_args)


# ----------------------------------------------------------------------------
# Parameters
# ----------------------------------------------------------------------------
def init_params(key, input_dim, hid_dim, pf_dim, n_layers):
    L, H, PF = n_layers, hid_dim, pf_dim
    keys = jax.random.split(key, 8)
    std = 0.02

    def w(k, shape):
        # Matmul weights in bf16 (MXU-native, half the VMEM/HBM traffic);
        # biases / LN params stay f32.
        return (jax.random.normal(k, shape, jnp.float32) * std
                ).astype(jnp.bfloat16)

    return {
        "tok_emb": jax.random.normal(keys[0], (input_dim, H), jnp.float32) * std,
        "pos_emb": jax.random.normal(keys[1], (1000, H), jnp.float32) * std,
        "wq": w(keys[2], (L, H, H)), "bq": jnp.zeros((L, 1, H), jnp.float32),
        "wk": w(keys[3], (L, H, H)), "bk": jnp.zeros((L, 1, H), jnp.float32),
        "wv": w(keys[4], (L, H, H)), "bv": jnp.zeros((L, 1, H), jnp.float32),
        "wo": w(keys[5], (L, H, H)), "bo": jnp.zeros((L, 1, H), jnp.float32),
        "g1": jnp.ones((L, 1, H), jnp.float32),
        "be1": jnp.zeros((L, 1, H), jnp.float32),
        "w1": w(keys[6], (L, H, PF)), "b1": jnp.zeros((L, 1, PF), jnp.float32),
        "w2": w(keys[7], (L, PF, H)), "b2": jnp.zeros((L, 1, H), jnp.float32),
        "g2": jnp.ones((L, 1, H), jnp.float32),
        "be2": jnp.zeros((L, 1, H), jnp.float32),
    }


# ----------------------------------------------------------------------------
if __name__ == "__main__":
    input_dim = 50    # vocab size
    hid_dim = 32
    n_layers = 2
    n_heads = 4
    pf_dim = 64
    B, S = 2, 8
    pad_idx = 0

    root = jax.random.PRNGKey(0)
    k_param, k_src = jax.random.split(root)

    params = init_params(k_param, input_dim, hid_dim, pf_dim, n_layers)

    src = jax.random.randint(k_src, (B, S), 1, input_dim, dtype=jnp.int32)
    src = src.at[0, -2:].set(pad_idx)                      # some padding tokens
    src_mask = (src != pad_idx).astype(jnp.float32)[:, None, :]   # (B, 1, S)

    out = encoder_forward(params, src, src_mask, hid_dim, n_heads)
    out = jax.block_until_ready(out)

    assert out.shape == (B, S, hid_dim)
    assert bool(jnp.all(jnp.isfinite(out)))
    print("KERNEL_OK")
</pallas_src>

<mosaic_0001>
module attributes {stable_mosaic.version = 11 : i64} {
  func.func @encoder_stack_kernel(%arg0: i32, %arg1: i32, %arg2: memref<2x8x32xf32, #tpu.memory_space<vmem>>, %arg3: memref<8x32xf32, #tpu.memory_space<vmem>>, %arg4: memref<2x1x8xf32, #tpu.memory_space<vmem>>, %arg5: memref<1x32x32xbf16, #tpu.memory_space<vmem>>, %arg6: memref<1x1x32xf32, #tpu.memory_space<vmem>>, %arg7: memref<1x32x32xbf16, #tpu.memory_space<vmem>>, %arg8: memref<1x1x32xf32, #tpu.memory_space<vmem>>, %arg9: memref<1x32x32xbf16, #tpu.memory_space<vmem>>, %arg10: memref<1x1x32xf32, #tpu.memory_space<vmem>>, %arg11: memref<1x32x32xbf16, #tpu.memory_space<vmem>>, %arg12: memref<1x1x32xf32, #tpu.memory_space<vmem>>, %arg13: memref<1x1x32xf32, #tpu.memory_space<vmem>>, %arg14: memref<1x1x32xf32, #tpu.memory_space<vmem>>, %arg15: memref<1x32x64xbf16, #tpu.memory_space<vmem>>, %arg16: memref<1x1x64xf32, #tpu.memory_space<vmem>>, %arg17: memref<1x64x32xbf16, #tpu.memory_space<vmem>>, %arg18: memref<1x1x32xf32, #tpu.memory_space<vmem>>, %arg19: memref<1x1x32xf32, #tpu.memory_space<vmem>>, %arg20: memref<1x1x32xf32, #tpu.memory_space<vmem>>, %arg21: memref<2x8x32xf32, #tpu.memory_space<vmem>>, %arg22: memref<2x8x32xf32, #tpu.memory_space<vmem>>) attributes {dimension_semantics = [#tpu.dimension_semantics<parallel>, #tpu.dimension_semantics<arbitrary>], iteration_bounds = array<i64: 1, 2>, scalar_prefetch = 0 : i64, scratch_operands = 1 : i64, tpu.core_type = #tpu.core_type<tc>, window_params = [{transform_indices = @transform_0, window_bounds = array<i64: 2, 8, 32>}, {pipeline_mode = #tpu.pipeline_mode<synchronous>, transform_indices = @transform_1, window_bounds = array<i64: 8, 32>}, {transform_indices = @transform_2, window_bounds = array<i64: 2, 1, 8>}, {transform_indices = @transform_3, window_bounds = array<i64: 1, 32, 32>}, {transform_indices = @transform_4, window_bounds = array<i64: 1, 1, 32>}, {transform_indices = @transform_5, window_bounds = array<i64: 1, 32, 32>}, {transform_indices = @transform_6, window_bounds = array<i64: 1, 1, 32>}, {transform_indices = @transform_7, window_bounds = array<i64: 1, 32, 32>}, {transform_indices = @transform_8, window_bounds = array<i64: 1, 1, 32>}, {transform_indices = @transform_9, window_bounds = array<i64: 1, 32, 32>}, {transform_indices = @transform_10, window_bounds = array<i64: 1, 1, 32>}, {transform_indices = @transform_11, window_bounds = array<i64: 1, 1, 32>}, {transform_indices = @transform_12, window_bounds = array<i64: 1, 1, 32>}, {transform_indices = @transform_13, window_bounds = array<i64: 1, 32, 64>}, {transform_indices = @transform_14, window_bounds = array<i64: 1, 1, 64>}, {transform_indices = @transform_15, window_bounds = array<i64: 1, 64, 32>}, {transform_indices = @transform_16, window_bounds = array<i64: 1, 1, 32>}, {transform_indices = @transform_17, window_bounds = array<i64: 1, 1, 32>}, {transform_indices = @transform_18, window_bounds = array<i64: 1, 1, 32>}, {transform_indices = @transform_19, window_bounds = array<i64: 2, 8, 32>}]} {
    %c0_i32 = arith.constant 0 : i32
    %0 = arith.cmpi eq, %arg1, %c0_i32 : i32
    %1 = arith.extui %0 : i1 to i32
    %c0_i32_0 = arith.constant 0 : i32
    %2 = arith.cmpi ne, %1, %c0_i32_0 : i32
    scf.if %2 {
      %c0_82 = arith.constant 0 : index
      %c0_83 = arith.constant 0 : index
      %c0_84 = arith.constant 0 : index
      %167 = vector.load %arg2[%c0_82, %c0_83, %c0_84] : memref<2x8x32xf32, #tpu.memory_space<vmem>>, vector<2x8x32xf32>
      %cst_85 = arith.constant 5.65685415 : f32
      %168 = vector.broadcast %cst_85 : f32 to vector<2x8x32xf32>
      %169 = arith.mulf %167, %168 : vector<2x8x32xf32>
      %c0_86 = arith.constant 0 : index
      %c0_87 = arith.constant 0 : index
      %170 = vector.load %arg3[%c0_86, %c0_87] : memref<8x32xf32, #tpu.memory_space<vmem>>, vector<8x32xf32>
      %171 = vector.shape_cast %170 : vector<8x32xf32> to vector<1x8x32xf32>
      %172 = vector.broadcast %171 : vector<1x8x32xf32> to vector<2x8x32xf32>
      %173 = arith.addf %169, %172 : vector<2x8x32xf32>
      %c0_88 = arith.constant 0 : index
      %c0_89 = arith.constant 0 : index
      %c0_90 = arith.constant 0 : index
      %174 = vector.load %arg22[%c0_88, %c0_89, %c0_90] : memref<2x8x32xf32, #tpu.memory_space<vmem>>, vector<2x8x32xf32>
      tpu.vector_store %arg22[%c0_88, %c0_89, %c0_90], %173 {strides = array<i32>} : memref<2x8x32xf32, #tpu.memory_space<vmem>>, vector<2x8x32xf32>,
    } else {
    }
    %c0 = arith.constant 0 : index
    %c0_1 = arith.constant 0 : index
    %c0_2 = arith.constant 0 : index
    %3 = vector.load %arg4[%c0, %c0_1, %c0_2] : memref<2x1x8xf32, #tpu.memory_space<vmem>>, vector<2x1x8xf32>
    %cst = arith.constant 0.000000e+00 : f32
    %4 = vector.broadcast %cst : f32 to vector<2x1x8xf32>
    %5 = arith.cmpf oeq, %3, %4 : vector<2x1x8xf32>
    %cst_3 = arith.constant -1.000000e+10 : f32
    %cst_4 = arith.constant 0.000000e+00 : f32
    %6 = vector.broadcast %cst_3 : f32 to vector<2x1x8xf32>
    %7 = vector.broadcast %cst_4 : f32 to vector<2x1x8xf32>
    %8 = arith.select %5, %6, %7 : vector<2x1x8xi1>, vector<2x1x8xf32>
    %c0_5 = arith.constant 0 : index
    %c0_6 = arith.constant 0 : index
    %c0_7 = arith.constant 0 : index
    %9 = vector.load %arg22[%c0_5, %c0_6, %c0_7] : memref<2x8x32xf32, #tpu.memory_space<vmem>>, vector<2x8x32xf32>
    %c0_8 = arith.constant 0 : index
    %c0_9 = arith.constant 0 : index
    %c0_10 = arith.constant 0 : index
    %10 = vector.load %arg5[%c0_8, %c0_9, %c0_10] : memref<1x32x32xbf16, #tpu.memory_space<vmem>>, vector<1x32x32xbf16>
    %11 = vector.shape_cast %10 : vector<1x32x32xbf16> to vector<32x32xbf16>
    %c0_11 = arith.constant 0 : index
    %c0_12 = arith.constant 0 : index
    %c0_13 = arith.constant 0 : index
    %12 = vector.load %arg6[%c0_11, %c0_12, %c0_13] : memref<1x1x32xf32, #tpu.memory_space<vmem>>, vector<1x1x32xf32>
    %13 = vector.shape_cast %12 : vector<1x1x32xf32> to vector<1x32xf32>
    %c0_14 = arith.constant 0 : index
    %c0_15 = arith.constant 0 : index
    %c0_16 = arith.constant 0 : index
    %14 = vector.load %arg7[%c0_14, %c0_15, %c0_16] : memref<1x32x32xbf16, #tpu.memory_space<vmem>>, vector<1x32x32xbf16>
    %15 = vector.shape_cast %14 : vector<1x32x32xbf16> to vector<32x32xbf16>
    %c0_17 = arith.constant 0 : index
    %c0_18 = arith.constant 0 : index
    %c0_19 = arith.constant 0 : index
    %16 = vector.load %arg8[%c0_17, %c0_18, %c0_19] : memref<1x1x32xf32, #tpu.memory_space<vmem>>, vector<1x1x32xf32>
    %17 = vector.shape_cast %16 : vector<1x1x32xf32> to vector<1x32xf32>
    %c0_20 = arith.constant 0 : index
    %c0_21 = arith.constant 0 : index
    %c0_22 = arith.constant 0 : index
    %18 = vector.load %arg9[%c0_20, %c0_21, %c0_22] : memref<1x32x32xbf16, #tpu.memory_space<vmem>>, vector<1x32x32xbf16>
    %19 = vector.shape_cast %18 : vector<1x32x32xbf16> to vector<32x32xbf16>
    %c0_23 = arith.constant 0 : index
    %c0_24 = arith.constant 0 : index
    %c0_25 = arith.constant 0 : index
    %20 = vector.load %arg10[%c0_23, %c0_24, %c0_25] : memref<1x1x32xf32, #tpu.memory_space<vmem>>, vector<1x1x32xf32>
    %21 = vector.shape_cast %20 : vector<1x1x32xf32> to vector<1x32xf32>
    %c0_26 = arith.constant 0 : index
    %c0_27 = arith.constant 0 : index
    %c0_28 = arith.constant 0 : index
    %22 = vector.load %arg11[%c0_26, %c0_27, %c0_28] : memref<1x32x32xbf16, #tpu.memory_space<vmem>>, vector<1x32x32xbf16>
    %23 = vector.shape_cast %22 : vector<1x32x32xbf16> to vector<32x32xbf16>
    %c0_29 = arith.constant 0 : index
    %c0_30 = arith.constant 0 : index
    %c0_31 = arith.constant 0 : index
    %24 = vector.load %arg12[%c0_29, %c0_30, %c0_31] : memref<1x1x32xf32, #tpu.memory_space<vmem>>, vector<1x1x32xf32>
    %25 = vector.shape_cast %24 : vector<1x1x32xf32> to vector<1x32xf32>
    %c0_32 = arith.constant 0 : index
    %c0_33 = arith.constant 0 : index
    %c0_34 = arith.constant 0 : index
    %26 = vector.load %arg13[%c0_32, %c0_33, %c0_34] : memref<1x1x32xf32, #tpu.memory_space<vmem>>, vector<1x1x32xf32>
    %27 = vector.shape_cast %26 : vector<1x1x32xf32> to vector<1x32xf32>
    %c0_35 = arith.constant 0 : index
    %c0_36 = arith.constant 0 : index
    %c0_37 = arith.constant 0 : index
    %28 = vector.load %arg14[%c0_35, %c0_36, %c0_37] : memref<1x1x32xf32, #tpu.memory_space<vmem>>, vector<1x1x32xf32>
    %29 = vector.shape_cast %28 : vector<1x1x32xf32> to vector<1x32xf32>
    %c0_38 = arith.constant 0 : index
    %c0_39 = arith.constant 0 : index
    %c0_40 = arith.constant 0 : index
    %30 = vector.load %arg15[%c0_38, %c0_39, %c0_40] : memref<1x32x64xbf16, #tpu.memory_space<vmem>>, vector<1x32x64xbf16>
    %31 = vector.shape_cast %30 : vector<1x32x64xbf16> to vector<32x64xbf16>
    %c0_41 = arith.constant 0 : index
    %c0_42 = arith.constant 0 : index
    %c0_43 = arith.constant 0 : index
    %32 = vector.load %arg16[%c0_41, %c0_42, %c0_43] : memref<1x1x64xf32, #tpu.memory_space<vmem>>, vector<1x1x64xf32>
    %33 = vector.shape_cast %32 : vector<1x1x64xf32> to vector<1x64xf32>
    %c0_44 = arith.constant 0 : index
    %c0_45 = arith.constant 0 : index
    %c0_46 = arith.constant 0 : index
    %34 = vector.load %arg17[%c0_44, %c0_45, %c0_46] : memref<1x64x32xbf16, #tpu.memory_space<vmem>>, vector<1x64x32xbf16>
    %35 = vector.shape_cast %34 : vector<1x64x32xbf16> to vector<64x32xbf16>
    %c0_47 = arith.constant 0 : index
    %c0_48 = arith.constant 0 : index
    %c0_49 = arith.constant 0 : index
    %36 = vector.load %arg18[%c0_47, %c0_48, %c0_49] : memref<1x1x32xf32, #tpu.memory_space<vmem>>, vector<1x1x32xf32>
    %37 = vector.shape_cast %36 : vector<1x1x32xf32> to vector<1x32xf32>
    %c0_50 = arith.constant 0 : index
    %c0_51 = arith.constant 0 : index
    %c0_52 = arith.constant 0 : index
    %38 = vector.load %arg19[%c0_50, %c0_51, %c0_52] : memref<1x1x32xf32, #tpu.memory_space<vmem>>, vector<1x1x32xf32>
    %39 = vector.shape_cast %38 : vector<1x1x32xf32> to vector<1x32xf32>
    %c0_53 = arith.constant 0 : index
    %c0_54 = arith.constant 0 : index
    %c0_55 = arith.constant 0 : index
    %40 = vector.load %arg20[%c0_53, %c0_54, %c0_55] : memref<1x1x32xf32, #tpu.memory_space<vmem>>, vector<1x1x32xf32>
    %41 = vector.shape_cast %40 : vector<1x1x32xf32> to vector<1x32xf32>
    %42 = vector.shape_cast %9 : vector<2x8x32xf32> to vector<16x32xf32>
    %43 = arith.truncf %42 : vector<16x32xf32> to vector<16x32xbf16>
    %cst_56 = arith.constant dense<0.000000e+00> : vector<16x32xf32>
    %44 = tpu.matmul %43, %11, %cst_56 {dimension_numbers = #tpu.dot_dimension_numbers<[1], [0], [0], [1], [0, 0, 1, 1], [], []>} : vector<16x32xbf16>, vector<32x32xbf16>, vector<16x32xf32> -> vector<16x32xf32>
    %45 = vector.broadcast %13 : vector<1x32xf32> to vector<16x32xf32>
    %46 = arith.addf %44, %45 : vector<16x32xf32>
    %cst_57 = arith.constant dense<0.000000e+00> : vector<16x32xf32>
    %47 = tpu.matmul %43, %15, %cst_57 {dimension_numbers = #tpu.dot_dimension_numbers<[1], [0], [0], [1], [0, 0, 1, 1], [], []>} : vector<16x32xbf16>, vector<32x32xbf16>, vector<16x32xf32> -> vector<16x32xf32>
    %48 = vector.broadcast %17 : vector<1x32xf32> to vector<16x32xf32>
    %49 = arith.addf %47, %48 : vector<16x32xf32>
    %cst_58 = arith.constant dense<0.000000e+00> : vector<16x32xf32>
    %50 = tpu.matmul %43, %19, %cst_58 {dimension_numbers = #tpu.dot_dimension_numbers<[1], [0], [0], [1], [0, 0, 1, 1], [], []>} : vector<16x32xbf16>, vector<32x32xbf16>, vector<16x32xf32> -> vector<16x32xf32>
    %51 = vector.broadcast %21 : vector<1x32xf32> to vector<16x32xf32>
    %52 = arith.addf %50, %51 : vector<16x32xf32>
    %53 = arith.truncf %46 : vector<16x32xf32> to vector<16x32xbf16>
    %54 = vector.shape_cast %53 : vector<16x32xbf16> to vector<2x8x32xbf16>
    %55 = arith.truncf %49 : vector<16x32xf32> to vector<16x32xbf16>
    %56 = vector.shape_cast %55 : vector<16x32xbf16> to vector<2x8x32xbf16>
    %57 = arith.truncf %52 : vector<16x32xf32> to vector<16x32xbf16>
    %58 = vector.shape_cast %57 : vector<16x32xbf16> to vector<2x8x32xbf16>
    %59 = vector.extract_strided_slice %54 {offsets = [0, 0, 0], sizes = [2, 8, 8], strides = [1, 1, 1]} : vector<2x8x32xbf16> to vector<2x8x8xbf16>
    %60 = vector.extract_strided_slice %54 {offsets = [0, 0, 8], sizes = [2, 8, 8], strides = [1, 1, 1]} : vector<2x8x32xbf16> to vector<2x8x8xbf16>
    %61 = vector.extract_strided_slice %54 {offsets = [0, 0, 16], sizes = [2, 8, 8], strides = [1, 1, 1]} : vector<2x8x32xbf16> to vector<2x8x8xbf16>
    %62 = vector.extract_strided_slice %54 {offsets = [0, 0, 24], sizes = [2, 8, 8], strides = [1, 1, 1]} : vector<2x8x32xbf16> to vector<2x8x8xbf16>
    %63 = tpu.concatenate %59, %60, %61, %62 in 0 : vector<2x8x8xbf16>, vector<2x8x8xbf16>, vector<2x8x8xbf16>, vector<2x8x8xbf16> -> vector<8x8x8xbf16>
    %64 = vector.extract_strided_slice %56 {offsets = [0, 0, 0], sizes = [2, 8, 8], strides = [1, 1, 1]} : vector<2x8x32xbf16> to vector<2x8x8xbf16>
    %65 = vector.extract_strided_slice %56 {offsets = [0, 0, 8], sizes = [2, 8, 8], strides = [1, 1, 1]} : vector<2x8x32xbf16> to vector<2x8x8xbf16>
    %66 = vector.extract_strided_slice %56 {offsets = [0, 0, 16], sizes = [2, 8, 8], strides = [1, 1, 1]} : vector<2x8x32xbf16> to vector<2x8x8xbf16>
    %67 = vector.extract_strided_slice %56 {offsets = [0, 0, 24], sizes = [2, 8, 8], strides = [1, 1, 1]} : vector<2x8x32xbf16> to vector<2x8x8xbf16>
    %68 = tpu.concatenate %64, %65, %66, %67 in 0 : vector<2x8x8xbf16>, vector<2x8x8xbf16>, vector<2x8x8xbf16>, vector<2x8x8xbf16> -> vector<8x8x8xbf16>
    %69 = vector.extract_strided_slice %58 {offsets = [0, 0, 0], sizes = [2, 8, 8], strides = [1, 1, 1]} : vector<2x8x32xbf16> to vector<2x8x8xbf16>
    %70 = vector.extract_strided_slice %58 {offsets = [0, 0, 8], sizes = [2, 8, 8], strides = [1, 1, 1]} : vector<2x8x32xbf16> to vector<2x8x8xbf16>
    %71 = vector.extract_strided_slice %58 {offsets = [0, 0, 16], sizes = [2, 8, 8], strides = [1, 1, 1]} : vector<2x8x32xbf16> to vector<2x8x8xbf16>
    %72 = vector.extract_strided_slice %58 {offsets = [0, 0, 24], sizes = [2, 8, 8], strides = [1, 1, 1]} : vector<2x8x32xbf16> to vector<2x8x8xbf16>
    %73 = tpu.concatenate %69, %70, %71, %72 in 0 : vector<2x8x8xbf16>, vector<2x8x8xbf16>, vector<2x8x8xbf16>, vector<2x8x8xbf16> -> vector<8x8x8xbf16>
    %74 = tpu.concatenate %8, %8, %8, %8 in 0 : vector<2x1x8xf32>, vector<2x1x8xf32>, vector<2x1x8xf32>, vector<2x1x8xf32> -> vector<8x1x8xf32>
    "tpu.trace_start"() <{level = 10 : i32, message = "bqd,bkd->bqk"}> : () -> ()
    %cst_59 = arith.constant dense<0.000000e+00> : vector<8x8x8xf32>
    %75 = tpu.matmul %63, %68, %cst_59 {dimension_numbers = #tpu.dot_dimension_numbers<[2], [2], [1], [1], [0, 0, 0, 1, 1, 1], [0], [0]>} : vector<8x8x8xbf16>, vector<8x8x8xbf16>, vector<8x8x8xf32> -> vector<8x8x8xf32>
    "tpu.trace_stop"() : () -> ()
    %cst_60 = arith.constant 0.353553385 : f32
    %76 = vector.broadcast %cst_60 : f32 to vector<8x8x8xf32>
    %77 = arith.mulf %75, %76 : vector<8x8x8xf32>
    %78 = vector.broadcast %74 : vector<8x1x8xf32> to vector<8x8x8xf32>
    %79 = arith.addf %77, %78 : vector<8x8x8xf32>
    %cst_61 = arith.constant dense<0xFF800000> : vector<8x8xf32>
    %80 = vector.multi_reduction <maximumf>, %79, %cst_61 [2] : vector<8x8x8xf32> to vector<8x8xf32>
    %81 = vector.shape_cast %80 : vector<8x8xf32> to vector<8x8x1xf32>
    %82 = vector.broadcast %81 : vector<8x8x1xf32> to vector<8x8x8xf32>
    %83 = arith.subf %79, %82 : vector<8x8x8xf32>
    %84 = math.exp %83 : vector<8x8x8xf32>
    %cst_62 = arith.constant dense<0.000000e+00> : vector<8x8xf32>
    %85 = vector.multi_reduction <add>, %84, %cst_62 [2] : vector<8x8x8xf32> to vector<8x8xf32>
    %86 = vector.shape_cast %85 : vector<8x8xf32> to vector<8x8x1xf32>
    %87 = tpu.reciprocal %86 {approx = true} : vector<8x8x1xf32> -> vector<8x8x1xf32>
    %88 = vector.broadcast %87 : vector<8x8x1xf32> to vector<8x8x8xf32>
    %89 = arith.mulf %84, %88 : vector<8x8x8xf32>
    %90 = arith.truncf %89 : vector<8x8x8xf32> to vector<8x8x8xbf16>
    "tpu.trace_start"() <{level = 10 : i32, message = "bqk,bkd->bqd"}> : () -> ()
    %cst_63 = arith.constant dense<0.000000e+00> : vector<8x8x8xf32>
    %91 = tpu.matmul %90, %73, %cst_63 {dimension_numbers = #tpu.dot_dimension_numbers<[2], [1], [1], [2], [0, 0, 0, 1, 1, 2], [0], [0]>} : vector<8x8x8xbf16>, vector<8x8x8xbf16>, vector<8x8x8xf32> -> vector<8x8x8xf32>
    "tpu.trace_stop"() : () -> ()
    %92 = vector.shape_cast %91 : vector<8x8x8xf32> to vector<4x16x8xf32>
    %93 = vector.extract_strided_slice %92 {offsets = [0, 0, 0], sizes = [1, 16, 8], strides = [1, 1, 1]} : vector<4x16x8xf32> to vector<1x16x8xf32>
    %94 = vector.shape_cast %93 : vector<1x16x8xf32> to vector<16x8xf32>
    %95 = vector.extract_strided_slice %92 {offsets = [1, 0, 0], sizes = [1, 16, 8], strides = [1, 1, 1]} : vector<4x16x8xf32> to vector<1x16x8xf32>
    %96 = vector.shape_cast %95 : vector<1x16x8xf32> to vector<16x8xf32>
    %97 = vector.extract_strided_slice %92 {offsets = [2, 0, 0], sizes = [1, 16, 8], strides = [1, 1, 1]} : vector<4x16x8xf32> to vector<1x16x8xf32>
    %98 = vector.shape_cast %97 : vector<1x16x8xf32> to vector<16x8xf32>
    %99 = vector.extract_strided_slice %92 {offsets = [3, 0, 0], sizes = [1, 16, 8], strides = [1, 1, 1]} : vector<4x16x8xf32> to vector<1x16x8xf32>
    %100 = vector.shape_cast %99 : vector<1x16x8xf32> to vector<16x8xf32>
    %101 = tpu.concatenate %94, %96, %98, %100 in 1 : vector<16x8xf32>, vector<16x8xf32>, vector<16x8xf32>, vector<16x8xf32> -> vector<16x32xf32>
    %102 = arith.truncf %101 : vector<16x32xf32> to vector<16x32xbf16>
    %cst_64 = arith.constant dense<0.000000e+00> : vector<16x32xf32>
    %103 = tpu.matmul %102, %23, %cst_64 {dimension_numbers = #tpu.dot_dimension_numbers<[1], [0], [0], [1], [0, 0, 1, 1], [], []>} : vector<16x32xbf16>, vector<32x32xbf16>, vector<16x32xf32> -> vector<16x32xf32>
    %104 = vector.broadcast %25 : vector<1x32xf32> to vector<16x32xf32>
    %105 = arith.addf %103, %104 : vector<16x32xf32>
    %106 = arith.addf %42, %105 : vector<16x32xf32>
    %cst_65 = arith.constant dense<0.000000e+00> : vector<16xf32>
    %107 = vector.multi_reduction <add>, %106, %cst_65 [1] : vector<16x32xf32> to vector<16xf32>
    %108 = vector.shape_cast %107 : vector<16xf32> to vector<16x1xf32>
    %cst_66 = arith.constant 3.200000e+01 : f32
    %109 = vector.broadcast %cst_66 : f32 to vector<16x1xf32>
    %110 = arith.divf %108, %109 : vector<16x1xf32>
    %111 = vector.broadcast %110 : vector<16x1xf32> to vector<16x32xf32>
    %112 = arith.subf %106, %111 : vector<16x32xf32>
    %113 = arith.mulf %112, %112 : vector<16x32xf32>
    %cst_67 = arith.constant dense<0.000000e+00> : vector<16xf32>
    %114 = vector.multi_reduction <add>, %113, %cst_67 [1] : vector<16x32xf32> to vector<16xf32>
    %115 = vector.shape_cast %114 : vector<16xf32> to vector<16x1xf32>
    %cst_68 = arith.constant 3.200000e+01 : f32
    %116 = vector.broadcast %cst_68 : f32 to vector<16x1xf32>
    %117 = arith.divf %115, %116 : vector<16x1xf32>
    %118 = vector.broadcast %110 : vector<16x1xf32> to vector<16x32xf32>
    %119 = arith.subf %106, %118 : vector<16x32xf32>
    %cst_69 = arith.constant 9.99999974E-6 : f32
    %120 = vector.broadcast %cst_69 : f32 to vector<16x1xf32>
    %121 = arith.addf %117, %120 : vector<16x1xf32>
    %122 = math.rsqrt %121 : vector<16x1xf32>
    %123 = vector.broadcast %122 : vector<16x1xf32> to vector<16x32xf32>
    %124 = arith.mulf %119, %123 : vector<16x32xf32>
    %125 = vector.broadcast %27 : vector<1x32xf32> to vector<16x32xf32>
    %126 = arith.mulf %124, %125 : vector<16x32xf32>
    %127 = vector.broadcast %29 : vector<1x32xf32> to vector<16x32xf32>
    %128 = arith.addf %126, %127 : vector<16x32xf32>
    %129 = arith.truncf %128 : vector<16x32xf32> to vector<16x32xbf16>
    %cst_70 = arith.constant dense<0.000000e+00> : vector<16x64xf32>
    %130 = tpu.matmul %129, %31, %cst_70 {dimension_numbers = #tpu.dot_dimension_numbers<[1], [0], [0], [1], [0, 0, 1, 1], [], []>} : vector<16x32xbf16>, vector<32x64xbf16>, vector<16x64xf32> -> vector<16x64xf32>
    %131 = vector.broadcast %33 : vector<1x64xf32> to vector<16x64xf32>
    %132 = arith.addf %130, %131 : vector<16x64xf32>
    %cst_71 = arith.constant 0.000000e+00 : f32
    %133 = vector.broadcast %cst_71 : f32 to vector<16x64xf32>
    %134 = arith.maximumf %132, %133 : vector<16x64xf32>
    %135 = arith.truncf %134 : vector<16x64xf32> to vector<16x64xbf16>
    %cst_72 = arith.constant dense<0.000000e+00> : vector<16x32xf32>
    %136 = tpu.matmul %135, %35, %cst_72 {dimension_numbers = #tpu.dot_dimension_numbers<[1], [0], [0], [1], [0, 0, 1, 1], [], []>} : vector<16x64xbf16>, vector<64x32xbf16>, vector<16x32xf32> -> vector<16x32xf32>
    %137 = vector.broadcast %37 : vector<1x32xf32> to vector<16x32xf32>
    %138 = arith.addf %136, %137 : vector<16x32xf32>
    %139 = arith.addf %128, %138 : vector<16x32xf32>
    %cst_73 = arith.constant dense<0.000000e+00> : vector<16xf32>
    %140 = vector.multi_reduction <add>, %139, %cst_73 [1] : vector<16x32xf32> to vector<16xf32>
    %141 = vector.shape_cast %140 : vector<16xf32> to vector<16x1xf32>
    %cst_74 = arith.constant 3.200000e+01 : f32
    %142 = vector.broadcast %cst_74 : f32 to vector<16x1xf32>
    %143 = arith.divf %141, %142 : vector<16x1xf32>
    %144 = vector.broadcast %143 : vector<16x1xf32> to vector<16x32xf32>
    %145 = arith.subf %139, %144 : vector<16x32xf32>
    %146 = arith.mulf %145, %145 : vector<16x32xf32>
    %cst_75 = arith.constant dense<0.000000e+00> : vector<16xf32>
    %147 = vector.multi_reduction <add>, %146, %cst_75 [1] : vector<16x32xf32> to vector<16xf32>
    %148 = vector.shape_cast %147 : vector<16xf32> to vector<16x1xf32>
    %cst_76 = arith.constant 3.200000e+01 : f32
    %149 = vector.broadcast %cst_76 : f32 to vector<16x1xf32>
    %150 = arith.divf %148, %149 : vector<16x1xf32>
    %151 = vector.broadcast %143 : vector<16x1xf32> to vector<16x32xf32>
    %152 = arith.subf %139, %151 : vector<16x32xf32>
    %cst_77 = arith.constant 9.99999974E-6 : f32
    %153 = vector.broadcast %cst_77 : f32 to vector<16x1xf32>
    %154 = arith.addf %150, %153 : vector<16x1xf32>
    %155 = math.rsqrt %154 : vector<16x1xf32>
    %156 = vector.broadcast %155 : vector<16x1xf32> to vector<16x32xf32>
    %157 = arith.mulf %152, %156 : vector<16x32xf32>
    %158 = vector.broadcast %39 : vector<1x32xf32> to vector<16x32xf32>
    %159 = arith.mulf %157, %158 : vector<16x32xf32>
    %160 = vector.broadcast %41 : vector<1x32xf32> to vector<16x32xf32>
    %161 = arith.addf %159, %160 : vector<16x32xf32>
    %162 = vector.shape_cast %161 : vector<16x32xf32> to vector<2x8x32xf32>
    %c0_78 = arith.constant 0 : index
    %c0_79 = arith.constant 0 : index
    %c0_80 = arith.constant 0 : index
    %163 = vector.load %arg22[%c0_78, %c0_79, %c0_80] : memref<2x8x32xf32, #tpu.memory_space<vmem>>, vector<2x8x32xf32>
    tpu.vector_store %arg22[%c0_78, %c0_79, %c0_80], %162 {strides = array<i32>} : memref<2x8x32xf32, #tpu.memory_space<vmem>>, vector<2x8x32xf32>,
    %c1_i32 = arith.constant 1 : i32
    %164 = arith.cmpi eq, %arg1, %c1_i32 : i32
    %165 = arith.extui %164 : i1 to i32
    %c0_i32_81 = arith.constant 0 : i32
    %166 = arith.cmpi ne, %165, %c0_i32_81 : i32
    scf.if %166 {
      %c0_82 = arith.constant 0 : index
      %c0_83 = arith.constant 0 : index
      %c0_84 = arith.constant 0 : index
      %167 = vector.load %arg21[%c0_82, %c0_83, %c0_84] : memref<2x8x32xf32, #tpu.memory_space<vmem>>, vector<2x8x32xf32>
      tpu.vector_store %arg21[%c0_82, %c0_83, %c0_84], %162 {strides = array<i32>} : memref<2x8x32xf32, #tpu.memory_space<vmem>>, vector<2x8x32xf32>,
    } else {
    }
    return
  }
  func.func @transform_0(%arg0: i32, %arg1: i32) -> (i32, i32, i32) {
    %c0_i32 = arith.constant 0 : i32
    %c0_i32_0 = arith.constant 0 : i32
    %c0_i32_1 = arith.constant 0 : i32
    return %arg0, %c0_i32, %c0_i32_0 : i32, i32, i32
  }
  func.func @transform_1(%arg0: i32, %arg1: i32) -> (i32, i32) {
    %c0_i32 = arith.constant 0 : i32
    %c0_i32_0 = arith.constant 0 : i32
    %c0_i32_1 = arith.constant 0 : i32
    return %c0_i32, %c0_i32_0 : i32, i32
  }
  func.func @transform_2(%arg0: i32, %arg1: i32) -> (i32, i32, i32) {
    %c0_i32 = arith.constant 0 : i32
    %c0_i32_0 = arith.constant 0 : i32
    %c0_i32_1 = arith.constant 0 : i32
    return %arg0, %c0_i32, %c0_i32_0 : i32, i32, i32
  }
  func.func @transform_3(%arg0: i32, %arg1: i32) -> (i32, i32, i32) {
    %c0_i32 = arith.constant 0 : i32
    %c0_i32_0 = arith.constant 0 : i32
    %c0_i32_1 = arith.constant 0 : i32
    return %arg1, %c0_i32, %c0_i32_0 : i32, i32, i32
  }
  func.func @transform_4(%arg0: i32, %arg1: i32) -> (i32, i32, i32) {
    %c0_i32 = arith.constant 0 : i32
    %c0_i32_0 = arith.constant 0 : i32
    %c0_i32_1 = arith.constant 0 : i32
    return %arg1, %c0_i32, %c0_i32_0 : i32, i32, i32
  }
  func.func @transform_5(%arg0: i32, %arg1: i32) -> (i32, i32, i32) {
    %c0_i32 = arith.constant 0 : i32
    %c0_i32_0 = arith.constant 0 : i32
    %c0_i32_1 = arith.constant 0 : i32
    return %arg1, %c0_i32, %c0_i32_0 : i32, i32, i32
  }
  func.func @transform_6(%arg0: i32, %arg1: i32) -> (i32, i32, i32) {
    %c0_i32 = arith.constant 0 : i32
    %c0_i32_0 = arith.constant 0 : i32
    %c0_i32_1 = arith.constant 0 : i32
    return %arg1, %c0_i32, %c0_i32_0 : i32, i32, i32
  }
  func.func @transform_7(%arg0: i32, %arg1: i32) -> (i32, i32, i32) {
    %c0_i32 = arith.constant 0 : i32
    %c0_i32_0 = arith.constant 0 : i32
    %c0_i32_1 = arith.constant 0 : i32
    return %arg1, %c0_i32, %c0_i32_0 : i32, i32, i32
  }
  func.func @transform_8(%arg0: i32, %arg1: i32) -> (i32, i32, i32) {
    %c0_i32 = arith.constant 0 : i32
    %c0_i32_0 = arith.constant 0 : i32
    %c0_i32_1 = arith.constant 0 : i32
    return %arg1, %c0_i32, %c0_i32_0 : i32, i32, i32
  }
  func.func @transform_9(%arg0: i32, %arg1: i32) -> (i32, i32, i32) {
    %c0_i32 = arith.constant 0 : i32
    %c0_i32_0 = arith.constant 0 : i32
    %c0_i32_1 = arith.constant 0 : i32
    return %arg1, %c0_i32, %c0_i32_0 : i32, i32, i32
  }
  func.func @transform_10(%arg0: i32, %arg1: i32) -> (i32, i32, i32) {
    %c0_i32 = arith.constant 0 : i32
    %c0_i32_0 = arith.constant 0 : i32
    %c0_i32_1 = arith.constant 0 : i32
    return %arg1, %c0_i32, %c0_i32_0 : i32, i32, i32
  }
  func.func @transform_11(%arg0: i32, %arg1: i32) -> (i32, i32, i32) {
    %c0_i32 = arith.constant 0 : i32
    %c0_i32_0 = arith.constant 0 : i32
    %c0_i32_1 = arith.constant 0 : i32
    return %arg1, %c0_i32, %c0_i32_0 : i32, i32, i32
  }
  func.func @transform_12(%arg0: i32, %arg1: i32) -> (i32, i32, i32) {
    %c0_i32 = arith.constant 0 : i32
    %c0_i32_0 = arith.constant 0 : i32
    %c0_i32_1 = arith.constant 0 : i32
    return %arg1, %c0_i32, %c0_i32_0 : i32, i32, i32
  }
  func.func @transform_13(%arg0: i32, %arg1: i32) -> (i32, i32, i32) {
    %c0_i32 = arith.constant 0 : i32
    %c0_i32_0 = arith.constant 0 : i32
    %c0_i32_1 = arith.constant 0 : i32
    return %arg1, %c0_i32, %c0_i32_0 : i32, i32, i32
  }
  func.func @transform_14(%arg0: i32, %arg1: i32) -> (i32, i32, i32) {
    %c0_i32 = arith.constant 0 : i32
    %c0_i32_0 = arith.constant 0 : i32
    %c0_i32_1 = arith.constant 0 : i32
    return %arg1, %c0_i32, %c0_i32_0 : i32, i32, i32
  }
  func.func @transform_15(%arg0: i32, %arg1: i32) -> (i32, i32, i32) {
    %c0_i32 = arith.constant 0 : i32
    %c0_i32_0 = arith.constant 0 : i32
    %c0_i32_1 = arith.constant 0 : i32
    return %arg1, %c0_i32, %c0_i32_0 : i32, i32, i32
  }
  func.func @transform_16(%arg0: i32, %arg1: i32) -> (i32, i32, i32) {
    %c0_i32 = arith.constant 0 : i32
    %c0_i32_0 = arith.constant 0 : i32
    %c0_i32_1 = arith.constant 0 : i32
    return %arg1, %c0_i32, %c0_i32_0 : i32, i32, i32
  }
  func.func @transform_17(%arg0: i32, %arg1: i32) -> (i32, i32, i32) {
    %c0_i32 = arith.constant 0 : i32
    %c0_i32_0 = arith.constant 0 : i32
    %c0_i32_1 = arith.constant 0 : i32
    return %arg1, %c0_i32, %c0_i32_0 : i32, i32, i32
  }
  func.func @transform_18(%arg0: i32, %arg1: i32) -> (i32, i32, i32) {
    %c0_i32 = arith.constant 0 : i32
    %c0_i32_0 = arith.constant 0 : i32
    %c0_i32_1 = arith.constant 0 : i32
    return %arg1, %c0_i32, %c0_i32_0 : i32, i32, i32
  }
  func.func @transform_19(%arg0: i32, %arg1: i32) -> (i32, i32, i32) {
    %c0_i32 = arith.constant 0 : i32
    %c0_i32_0 = arith.constant 0 : i32
    %c0_i32_1 = arith.constant 0 : i32
    return %arg0, %c0_i32, %c0_i32_0 : i32, i32, i32
  }
}

</mosaic_0001>

<llo_original>
// kernel: tpu_custom_call.1
$region0: #{tpu_custom_call.1}
  #allocation0 [shape = 'u32[]', space=smem, size = 0x4, offset = 0x4, fixed_abs, tag = 'smem constant byte address 0x4 - core index']
  #allocation1 [shape = 'u32[144,128]{1,0:T(1,128)}', space=vmem, size = 0x12000, scoped, tag = 'internal scratch']
  #allocation2 [shape = 'f32[2,8,32]{2,1,0:T(8,128)}', space=vmem, size = 0x2000, scoped, tag = 'scratch operand']
  %s0 = inlined_call_operand.hbm [shape: f32[2,8,32], index: 0, kind: input, shape index: {}]
  %s1 = inlined_call_operand.hbm [shape: f32[8,32], index: 1, kind: input, shape index: {}]
  %s2 = inlined_call_operand.vmem [shape: f32[2,1,8], index: 2, kind: input, shape index: {}]
  %s3 = inlined_call_operand.vmem [shape: bf16[2,32,32], index: 3, kind: input, shape index: {}]
  %s4 = inlined_call_operand.vmem [shape: f32[2,1,32], index: 4, kind: input, shape index: {}]
  %s5 = inlined_call_operand.vmem [shape: bf16[2,32,32], index: 5, kind: input, shape index: {}]
  %s6 = inlined_call_operand.vmem [shape: f32[2,1,32], index: 6, kind: input, shape index: {}]
  %s7 = inlined_call_operand.vmem [shape: bf16[2,32,32], index: 7, kind: input, shape index: {}]
  %s8 = inlined_call_operand.vmem [shape: f32[2,1,32], index: 8, kind: input, shape index: {}]
  %s9 = inlined_call_operand.hbm [shape: bf16[2,32,32], index: 9, kind: input, shape index: {}]
  %s10 = inlined_call_operand.vmem [shape: f32[2,1,32], index: 10, kind: input, shape index: {}]
  %s11 = inlined_call_operand.vmem [shape: f32[2,1,32], index: 11, kind: input, shape index: {}]
  %s12 = inlined_call_operand.vmem [shape: f32[2,1,32], index: 12, kind: input, shape index: {}]
  %s13 = inlined_call_operand.hbm [shape: bf16[2,32,64], index: 13, kind: input, shape index: {}]
  %s14 = inlined_call_operand.vmem [shape: f32[2,1,64], index: 14, kind: input, shape index: {}]
  %s15 = inlined_call_operand.vmem [shape: bf16[2,64,32], index: 15, kind: input, shape index: {}]
  %s16 = inlined_call_operand.vmem [shape: f32[2,1,32], index: 16, kind: input, shape index: {}]
  %s17 = inlined_call_operand.vmem [shape: f32[2,1,32], index: 17, kind: input, shape index: {}]
  %s18 = inlined_call_operand.vmem [shape: f32[2,1,32], index: 18, kind: input, shape index: {}]
  %s19 = inlined_call_operand.hbm [shape: f32[2,8,32], index: 19, kind: output, shape index: {}]
  %s20 = sld [smem:[#allocation0]]
  $region133: #{tpu_custom_call.1} parent=0
    _
  %s22 = ssub.s32 1, %s20
  %s23 = scalar_select 0, %s22, %s20
  $region1: #{tpu_custom_call.1} parent=0
    #allocation3 [shape = 'u8[8192]{0}', space=vmem, size = 0x2000, scoped, tag = 'input window, operand 0, single buffered']
    #allocation4 [shape = 's32[2]{0}', space=sflag, size = 0x8, scoped, tag = 'scoped memory for tpu_custom_call.1']
    #allocation5 [shape = 's32[2]{0}', space=sflag, size = 0x8, scoped, tag = 'scoped memory for tpu_custom_call.1']
    #allocation6 [shape = 'u8[4096]{0}', space=vmem, size = 0x1000, scoped, tag = 'input window, operand 1, single buffered']
    #allocation7 [shape = 's32[1]{0}', space=sflag, size = 0x4, scoped, tag = 'scoped memory for tpu_custom_call.1']
    #allocation8 [shape = 'u8[16384]{0}', space=vmem, size = 0x4000, scoped, tag = 'input window, operand 9']
    #allocation9 [shape = 'u8[16384]{0}', space=vmem, size = 0x4000, scoped, tag = 'input window, operand 13']
    #allocation10 [shape = 'u8[8192]{0}', space=vmem, size = 0x2000, scoped, tag = 'output window, operand 0, single buffered']
    %24 = vsyncpa [#allocation4], 0
    %25 = vsyncpa [#allocation7], 0
    %26 = vsyncpa [#allocation5], 0
    loop: start=0, step=1, limit=4
    $region2: #{tpu_custom_call.1} parent=1 // loop_pre_header
      _
    $region3: #{tpu_custom_call.1} parent=1 // loop_header
      %s28 = sphi 0, %s32
      %p29 = scmp.ge.s32.totalorder %s28, 4
      %s35 = sphi 0, %s47
      %s36 = sphi 0, %s43
      %s37 = sphi 0, %s35
      %s38 = sphi 0, %s36
      %s39 = sphi 0, %s37
      %s40 = sphi 0, %s38
      %s50 = sphi 0, %s52
      %s53 = sphi 0, %s50
      %s54 = sphi 0, %s53
      %s70 = sphi 0, %s54
      %s74 = sphi 0, %s74
      %s76 = sphi 0, %s74
      %s77 = sphi 0, %s76
      %s91 = sphi 0, %s77
      %s97 = sphi 0, %s99
      %s100 = sphi 0, %s97
      %s101 = sphi 0, %s100
      %s117 = sphi 0, %s101
      %s123 = sphi 0, %s125
      %s126 = sphi 0, %s123
      %s127 = sphi 0, %s126
      %s143 = sphi 0, %s127
      %s149 = sphi 0, %s151
      %s152 = sphi 0, %s149
      %s153 = sphi 0, %s152
      %s169 = sphi 0, %s153
      %s175 = sphi 0, %s177
      %s178 = sphi 0, %s175
      %s179 = sphi 0, %s178
      %s195 = sphi 0, %s179
      %s201 = sphi 0, %s203
      %s204 = sphi 0, %s201
      %s205 = sphi 0, %s204
      %s221 = sphi 0, %s205
      %s227 = sphi 0, %s229
      %s230 = sphi 0, %s227
      %s231 = sphi 0, %s230
      %s247 = sphi 0, %s231
      %s253 = sphi 0, %s255
      %s256 = sphi 0, %s253
      %s257 = sphi 0, %s256
      %s273 = sphi 0, %s257
      %s279 = sphi 0, %s281
      %s282 = sphi 0, %s279
      %s283 = sphi 0, %s282
      %s299 = sphi 0, %s283
      %s305 = sphi 0, %s307
      %s308 = sphi 0, %s305
      %s309 = sphi 0, %s308
      %s325 = sphi 0, %s309
      %s331 = sphi 0, %s333
      %s334 = sphi 0, %s331
      %s335 = sphi 0, %s334
      %s351 = sphi 0, %s335
      %s357 = sphi 0, %s359
      %s360 = sphi 0, %s357
      %s361 = sphi 0, %s360
      %s377 = sphi 0, %s361
      %s383 = sphi 0, %s385
      %s386 = sphi 0, %s383
      %s387 = sphi 0, %s386
      %s403 = sphi 0, %s387
      %s409 = sphi 0, %s411
      %s412 = sphi 0, %s409
      %s413 = sphi 0, %s412
      %s429 = sphi 0, %s413
      %s435 = sphi 0, %s437
      %s438 = sphi 0, %s435
      %s439 = sphi 0, %s438
      %s455 = sphi 0, %s439
      %s461 = sphi 0, %s463
      %s464 = sphi 0, %s461
      %s465 = sphi 0, %s464
      %s481 = sphi 0, %s465
      %s487 = sphi 0, %s489
      %s490 = sphi 0, %s487
      %s491 = sphi 0, %s490
      %s507 = sphi 0, %s491
      %s513 = sphi 0, %s515
      %s516 = sphi 0, %s513
      %s517 = sphi 0, %s516
      %s533 = sphi 0, %s517
      %s539 = sphi 0, %s541
      %s542 = sphi 0, %s539
      %s543 = sphi 0, %s542
      %s559 = sphi 0, %s543
    $region4: #{tpu_custom_call.1} parent=1 // loop_header_branch
      %31 = sbr.rel (%p29) target = $region8
    $region5: #{tpu_custom_call.1} parent=1 // loop_body
      %s33 = ssub.s32 %s28, 1
      %s34 = ssub.s32 %s28, 2
      %s41 = sadd.s32 1, %s36
      %p42 = scmp.ge.s32.totalorder %s41, 2
      %s43 = scalar_select %p42, 0, %s41
      %s44 = sadd.s32 1, %s35
      %s45 = scalar_select %p42, %s44, %s35
      %p46 = scmp.ge.s32.totalorder %s45, 1
      %s47 = scalar_select %p46, 0, %s45
      %s48 = ssub.s32 %s35, %s47
      %p49 = scmp.eq.s32.totalorder %s48, 0
      %s51 = sadd.s32 %s50, 1
      %s52 = scalar_select %p49, %s50, %s51
      %p55 = pneg %p49
      %p56 = scmp.eq.s32.totalorder %s28, 1
      %p57 = por %p55, %p56
      %p58 = scmp.ne.s32.totalorder %s50, %s53
      %p59 = scmp.eq.s32.totalorder %s28, 0
      %p60 = por %p58, %p59
      %p61 = scmp.ne.s32.totalorder %s50, %s53
      %p62 = scmp.eq.s32.totalorder %s33, 1
      %p63 = por %p61, %p62
      %p64 = scmp.ne.s32.totalorder %s53, %s54
      %p65 = scmp.eq.s32.totalorder %s33, 0
      %p66 = por %p64, %p65
      %p67 = scmp.ne.s32.totalorder %s53, %s54
      %p68 = scmp.eq.s32.totalorder %s34, 1
      %p69 = por %p67, %p68
      %p71 = scmp.ne.s32.totalorder %s54, %s70
      %p72 = scmp.eq.s32.totalorder %s34, 0
      %p73 = por %p71, %p72
      %s75 = sadd.s32 %s74, 1
      %p78 = scmp.eq.s32.totalorder %s28, 1
      %p79 = scmp.ne.s32.totalorder %s74, %s76
      %p80 = scmp.eq.s32.totalorder %s28, 0
      %p81 = por %p79, %p80
      %p82 = scmp.ne.s32.totalorder %s74, %s76
      %p83 = scmp.eq.s32.totalorder %s33, 1
      %p84 = por %p82, %p83
      %p85 = scmp.ne.s32.totalorder %s76, %s77
      %p86 = scmp.eq.s32.totalorder %s33, 0
      %p87 = por %p85, %p86
      %p88 = scmp.ne.s32.totalorder %s76, %s77
      %p89 = scmp.eq.s32.totalorder %s34, 1
      %p90 = por %p88, %p89
      %p92 = scmp.ne.s32.totalorder %s77, %s91
      %p93 = scmp.eq.s32.totalorder %s34, 0
      %p94 = por %p92, %p93
      %s95 = ssub.s32 %s35, %s47
      %p96 = scmp.eq.s32.totalorder %s95, 0
      %s98 = sadd.s32 %s97, 1
      %s99 = scalar_select %p96, %s97, %s98
      %p102 = pneg %p96
      %p103 = scmp.eq.s32.totalorder %s28, 1
      %p104 = por %p102, %p103
      %p105 = scmp.ne.s32.totalorder %s97, %s100
      %p106 = scmp.eq.s32.totalorder %s28, 0
      %p107 = por %p105, %p106
      %p108 = scmp.ne.s32.totalorder %s97, %s100
      %p109 = scmp.eq.s32.totalorder %s33, 1
      %p110 = por %p108, %p109
      %p111 = scmp.ne.s32.totalorder %s100, %s101
      %p112 = scmp.eq.s32.totalorder %s33, 0
      %p113 = por %p111, %p112
      %p114 = scmp.ne.s32.totalorder %s100, %s101
      %p115 = scmp.eq.s32.totalorder %s34, 1
      %p116 = por %p114, %p115
      %p118 = scmp.ne.s32.totalorder %s101, %s117
      %p119 = scmp.eq.s32.totalorder %s34, 0
      %p120 = por %p118, %p119
      %s121 = ssub.s32 %s36, %s43
      %p122 = scmp.eq.s32.totalorder %s121, 0
      %s124 = sadd.s32 %s123, 1
      %s125 = scalar_select %p122, %s123, %s124
      %p128 = pneg %p122
      %p129 = scmp.eq.s32.totalorder %s28, 1
      %p130 = por %p128, %p129
      %p131 = scmp.ne.s32.totalorder %s123, %s126
      %p132 = scmp.eq.s32.totalorder %s28, 0
      %p133 = por %p131, %p132
      %p134 = scmp.ne.s32.totalorder %s123, %s126
      %p135 = scmp.eq.s32.totalorder %s33, 1
      %p136 = por %p134, %p135
      %p137 = scmp.ne.s32.totalorder %s126, %s127
      %p138 = scmp.eq.s32.totalorder %s33, 0
      %p139 = por %p137, %p138
      %p140 = scmp.ne.s32.totalorder %s126, %s127
      %p141 = scmp.eq.s32.totalorder %s34, 1
      %p142 = por %p140, %p141
      %p144 = scmp.ne.s32.totalorder %s127, %s143
      %p145 = scmp.eq.s32.totalorder %s34, 0
      %p146 = por %p144, %p145
      %s147 = ssub.s32 %s36, %s43
      %p148 = scmp.eq.s32.totalorder %s147, 0
      %s150 = sadd.s32 %s149, 1
      %s151 = scalar_select %p148, %s149, %s150
      %p154 = pneg %p148
      %p155 = scmp.eq.s32.totalorder %s28, 1
      %p156 = por %p154, %p155
      %p157 = scmp.ne.s32.totalorder %s149, %s152
      %p158 = scmp.eq.s32.totalorder %s28, 0
      %p159 = por %p157, %p158
      %p160 = scmp.ne.s32.totalorder %s149, %s152
      %p161 = scmp.eq.s32.totalorder %s33, 1
      %p162 = por %p160, %p161
      %p163 = scmp.ne.s32.totalorder %s152, %s153
      %p164 = scmp.eq.s32.totalorder %s33, 0
      %p165 = por %p163, %p164
      %p166 = scmp.ne.s32.totalorder %s152, %s153
      %p167 = scmp.eq.s32.totalorder %s34, 1
      %p168 = por %p166, %p167
      %p170 = scmp.ne.s32.totalorder %s153, %s169
      %p171 = scmp.eq.s32.totalorder %s34, 0
      %p172 = por %p170, %p171
      %s173 = ssub.s32 %s36, %s43
      %p174 = scmp.eq.s32.totalorder %s173, 0
      %s176 = sadd.s32 %s175, 1
      %s177 = scalar_select %p174, %s175, %s176
      %p180 = pneg %p174
      %p181 = scmp.eq.s32.totalorder %s28, 1
      %p182 = por %p180, %p181
      %p183 = scmp.ne.s32.totalorder %s175, %s178
      %p184 = scmp.eq.s32.totalorder %s28, 0
      %p185 = por %p183, %p184
      %p186 = scmp.ne.s32.totalorder %s175, %s178
      %p187 = scmp.eq.s32.totalorder %s33, 1
      %p188 = por %p186, %p187
      %p189 = scmp.ne.s32.totalorder %s178, %s179
      %p190 = scmp.eq.s32.totalorder %s33, 0
      %p191 = por %p189, %p190
      %p192 = scmp.ne.s32.totalorder %s178, %s179
      %p193 = scmp.eq.s32.totalorder %s34, 1
      %p194 = por %p192, %p193
      %p196 = scmp.ne.s32.totalorder %s179, %s195
      %p197 = scmp.eq.s32.totalorder %s34, 0
      %p198 = por %p196, %p197
      %s199 = ssub.s32 %s36, %s43
      %p200 = scmp.eq.s32.totalorder %s199, 0
      %s202 = sadd.s32 %s201, 1
      %s203 = scalar_select %p200, %s201, %s202
      %p206 = pneg %p200
      %p207 = scmp.eq.s32.totalorder %s28, 1
      %p208 = por %p206, %p207
      %p209 = scmp.ne.s32.totalorder %s201, %s204
      %p210 = scmp.eq.s32.totalorder %s28, 0
      %p211 = por %p209, %p210
      %p212 = scmp.ne.s32.totalorder %s201, %s204
      %p213 = scmp.eq.s32.totalorder %s33, 1
      %p214 = por %p212, %p213
      %p215 = scmp.ne.s32.totalorder %s204, %s205
      %p216 = scmp.eq.s32.totalorder %s33, 0
      %p217 = por %p215, %p216
      %p218 = scmp.ne.s32.totalorder %s204, %s205
      %p219 = scmp.eq.s32.totalorder %s34, 1
      %p220 = por %p218, %p219
      %p222 = scmp.ne.s32.totalorder %s205, %s221
      %p223 = scmp.eq.s32.totalorder %s34, 0
      %p224 = por %p222, %p223
      %s225 = ssub.s32 %s36, %s43
      %p226 = scmp.eq.s32.totalorder %s225, 0
      %s228 = sadd.s32 %s227, 1
      %s229 = scalar_select %p226, %s227, %s228
      %p232 = pneg %p226
      %p233 = scmp.eq.s32.totalorder %s28, 1
      %p234 = por %p232, %p233
      %p235 = scmp.ne.s32.totalorder %s227, %s230
      %p236 = scmp.eq.s32.totalorder %s28, 0
      %p237 = por %p235, %p236
      %p238 = scmp.ne.s32.totalorder %s227, %s230
      %p239 = scmp.eq.s32.totalorder %s33, 1
      %p240 = por %p238, %p239
      %p241 = scmp.ne.s32.totalorder %s230, %s231
      %p242 = scmp.eq.s32.totalorder %s33, 0
      %p243 = por %p241, %p242
      %p244 = scmp.ne.s32.totalorder %s230, %s231
      %p245 = scmp.eq.s32.totalorder %s34, 1
      %p246 = por %p244, %p245
      %p248 = scmp.ne.s32.totalorder %s231, %s247
      %p249 = scmp.eq.s32.totalorder %s34, 0
      %p250 = por %p248, %p249
      %s251 = ssub.s32 %s36, %s43
      %p252 = scmp.eq.s32.totalorder %s251, 0
      %s254 = sadd.s32 %s253, 1
      %s255 = scalar_select %p252, %s253, %s254
      %p258 = pneg %p252
      %p259 = scmp.eq.s32.totalorder %s28, 1
      %p260 = por %p258, %p259
      %p261 = scmp.ne.s32.totalorder %s253, %s256
      %p262 = scmp.eq.s32.totalorder %s28, 0
      %p263 = por %p261, %p262
      %p264 = scmp.ne.s32.totalorder %s253, %s256
      %p265 = scmp.eq.s32.totalorder %s33, 1
      %p266 = por %p264, %p265
      %p267 = scmp.ne.s32.totalorder %s256, %s257
      %p268 = scmp.eq.s32.totalorder %s33, 0
      %p269 = por %p267, %p268
      %p270 = scmp.ne.s32.totalorder %s256, %s257
      %p271 = scmp.eq.s32.totalorder %s34, 1
      %p272 = por %p270, %p271
      %p274 = scmp.ne.s32.totalorder %s257, %s273
      %p275 = scmp.eq.s32.totalorder %s34, 0
      %p276 = por %p274, %p275
      %s277 = ssub.s32 %s36, %s43
      %p278 = scmp.eq.s32.totalorder %s277, 0
      %s280 = sadd.s32 %s279, 1
      %s281 = scalar_select %p278, %s279, %s280
      %p284 = pneg %p278
      %p285 = scmp.eq.s32.totalorder %s28, 1
      %p286 = por %p284, %p285
      %p287 = scmp.ne.s32.totalorder %s279, %s282
      %p288 = scmp.eq.s32.totalorder %s28, 0
      %p289 = por %p287, %p288
      %p290 = scmp.ne.s32.totalorder %s279, %s282
      %p291 = scmp.eq.s32.totalorder %s33, 1
      %p292 = por %p290, %p291
      %p293 = scmp.ne.s32.totalorder %s282, %s283
      %p294 = scmp.eq.s32.totalorder %s33, 0
      %p295 = por %p293, %p294
      %p296 = scmp.ne.s32.totalorder %s282, %s283
      %p297 = scmp.eq.s32.totalorder %s34, 1
      %p298 = por %p296, %p297
      %p300 = scmp.ne.s32.totalorder %s283, %s299
      %p301 = scmp.eq.s32.totalorder %s34, 0
      %p302 = por %p300, %p301
      %s303 = ssub.s32 %s36, %s43
      %p304 = scmp.eq.s32.totalorder %s303, 0
      %s306 = sadd.s32 %s305, 1
      %s307 = scalar_select %p304, %s305, %s306
      %p310 = pneg %p304
      %p311 = scmp.eq.s32.totalorder %s28, 1
      %p312 = por %p310, %p311
      %p313 = scmp.ne.s32.totalorder %s305, %s308
      %p314 = scmp.eq.s32.totalorder %s28, 0
      %p315 = por %p313, %p314
      %p316 = scmp.ne.s32.totalorder %s305, %s308
      %p317 = scmp.eq.s32.totalorder %s33, 1
      %p318 = por %p316, %p317
      %p319 = scmp.ne.s32.totalorder %s308, %s309
      %p320 = scmp.eq.s32.totalorder %s33, 0
      %p321 = por %p319, %p320
      %p322 = scmp.ne.s32.totalorder %s308, %s309
      %p323 = scmp.eq.s32.totalorder %s34, 1
      %p324 = por %p322, %p323
      %p326 = scmp.ne.s32.totalorder %s309, %s325
      %p327 = scmp.eq.s32.totalorder %s34, 0
      %p328 = por %p326, %p327
      %s329 = ssub.s32 %s36, %s43
      %p330 = scmp.eq.s32.totalorder %s329, 0
      %s332 = sadd.s32 %s331, 1
      %s333 = scalar_select %p330, %s331, %s332
      %p336 = pneg %p330
      %p337 = scmp.eq.s32.totalorder %s28, 1
      %p338 = por %p336, %p337
      %p339 = scmp.ne.s32.totalorder %s331, %s334
      %p340 = scmp.eq.s32.totalorder %s28, 0
      %p341 = por %p339, %p340
      %p342 = scmp.ne.s32.totalorder %s331, %s334
      %p343 = scmp.eq.s32.totalorder %s33, 1
      %p344 = por %p342, %p343
      %p345 = scmp.ne.s32.totalorder %s334, %s335
      %p346 = scmp.eq.s32.totalorder %s33, 0
      %p347 = por %p345, %p346
      %p348 = scmp.ne.s32.totalorder %s334, %s335
      %p349 = scmp.eq.s32.totalorder %s34, 1
      %p350 = por %p348, %p349
      %p352 = scmp.ne.s32.totalorder %s335, %s351
      %p353 = scmp.eq.s32.totalorder %s34, 0
      %p354 = por %p352, %p353
      %s355 = ssub.s32 %s36, %s43
      %p356 = scmp.eq.s32.totalorder %s355, 0
      %s358 = sadd.s32 %s357, 1
      %s359 = scalar_select %p356, %s357, %s358
      %p362 = pneg %p356
      %p363 = scmp.eq.s32.totalorder %s28, 1
      %p364 = por %p362, %p363
      %p365 = scmp.ne.s32.totalorder %s357, %s360
      %p366 = scmp.eq.s32.totalorder %s28, 0
      %p367 = por %p365, %p366
      %p368 = scmp.ne.s32.totalorder %s357, %s360
      %p369 = scmp.eq.s32.totalorder %s33, 1
      %p370 = por %p368, %p369
      %p371 = scmp.ne.s32.totalorder %s360, %s361
      %p372 = scmp.eq.s32.totalorder %s33, 0
      %p373 = por %p371, %p372
      %p374 = scmp.ne.s32.totalorder %s360, %s361
      %p375 = scmp.eq.s32.totalorder %s34, 1
      %p376 = por %p374, %p375
      %p378 = scmp.ne.s32.totalorder %s361, %s377
      %p379 = scmp.eq.s32.totalorder %s34, 0
      %p380 = por %p378, %p379
      %s381 = ssub.s32 %s36, %s43
      %p382 = scmp.eq.s32.totalorder %s381, 0
      %s384 = sadd.s32 %s383, 1
      %s385 = scalar_select %p382, %s383, %s384
      %p388 = pneg %p382
      %p389 = scmp.eq.s32.totalorder %s28, 1
      %p390 = por %p388, %p389
      %p391 = scmp.ne.s32.totalorder %s383, %s386
      %p392 = scmp.eq.s32.totalorder %s28, 0
      %p393 = por %p391, %p392
      %p394 = scmp.ne.s32.totalorder %s383, %s386
      %p395 = scmp.eq.s32.totalorder %s33, 1
      %p396 = por %p394, %p395
      %p397 = scmp.ne.s32.totalorder %s386, %s387
      %p398 = scmp.eq.s32.totalorder %s33, 0
      %p399 = por %p397, %p398
      %p400 = scmp.ne.s32.totalorder %s386, %s387
      %p401 = scmp.eq.s32.totalorder %s34, 1
      %p402 = por %p400, %p401
      %p404 = scmp.ne.s32.totalorder %s387, %s403
      %p405 = scmp.eq.s32.totalorder %s34, 0
      %p406 = por %p404, %p405
      %s407 = ssub.s32 %s36, %s43
      %p408 = scmp.eq.s32.totalorder %s407, 0
      %s410 = sadd.s32 %s409, 1
      %s411 = scalar_select %p408, %s409, %s410
      %p414 = pneg %p408
      %p415 = scmp.eq.s32.totalorder %s28, 1
      %p416 = por %p414, %p415
      %p417 = scmp.ne.s32.totalorder %s409, %s412
      %p418 = scmp.eq.s32.totalorder %s28, 0
      %p419 = por %p417, %p418
      %p420 = scmp.ne.s32.totalorder %s409, %s412
      %p421 = scmp.eq.s32.totalorder %s33, 1
      %p422 = por %p420, %p421
      %p423 = scmp.ne.s32.totalorder %s412, %s413
      %p424 = scmp.eq.s32.totalorder %s33, 0
      %p425 = por %p423, %p424
      %p426 = scmp.ne.s32.totalorder %s412, %s413
      %p427 = scmp.eq.s32.totalorder %s34, 1
      %p428 = por %p426, %p427
      %p430 = scmp.ne.s32.totalorder %s413, %s429
      %p431 = scmp.eq.s32.totalorder %s34, 0
      %p432 = por %p430, %p431
      %s433 = ssub.s32 %s36, %s43
      %p434 = scmp.eq.s32.totalorder %s433, 0
      %s436 = sadd.s32 %s435, 1
      %s437 = scalar_select %p434, %s435, %s436
      %p440 = pneg %p434
      %p441 = scmp.eq.s32.totalorder %s28, 1
      %p442 = por %p440, %p441
      %p443 = scmp.ne.s32.totalorder %s435, %s438
      %p444 = scmp.eq.s32.totalorder %s28, 0
      %p445 = por %p443, %p444
      %p446 = scmp.ne.s32.totalorder %s435, %s438
      %p447 = scmp.eq.s32.totalorder %s33, 1
      %p448 = por %p446, %p447
      %p449 = scmp.ne.s32.totalorder %s438, %s439
      %p450 = scmp.eq.s32.totalorder %s33, 0
      %p451 = por %p449, %p450
      %p452 = scmp.ne.s32.totalorder %s438, %s439
      %p453 = scmp.eq.s32.totalorder %s34, 1
      %p454 = por %p452, %p453
      %p456 = scmp.ne.s32.totalorder %s439, %s455
      %p457 = scmp.eq.s32.totalorder %s34, 0
      %p458 = por %p456, %p457
      %s459 = ssub.s32 %s36, %s43
      %p460 = scmp.eq.s32.totalorder %s459, 0
      %s462 = sadd.s32 %s461, 1
      %s463 = scalar_select %p460, %s461, %s462
      %p466 = pneg %p460
      %p467 = scmp.eq.s32.totalorder %s28, 1
      %p468 = por %p466, %p467
      %p469 = scmp.ne.s32.totalorder %s461, %s464
      %p470 = scmp.eq.s32.totalorder %s28, 0
      %p471 = por %p469, %p470
      %p472 = scmp.ne.s32.totalorder %s461, %s464
      %p473 = scmp.eq.s32.totalorder %s33, 1
      %p474 = por %p472, %p473
      %p475 = scmp.ne.s32.totalorder %s464, %s465
      %p476 = scmp.eq.s32.totalorder %s33, 0
      %p477 = por %p475, %p476
      %p478 = scmp.ne.s32.totalorder %s464, %s465
      %p479 = scmp.eq.s32.totalorder %s34, 1
      %p480 = por %p478, %p479
      %p482 = scmp.ne.s32.totalorder %s465, %s481
      %p483 = scmp.eq.s32.totalorder %s34, 0
      %p484 = por %p482, %p483
      %s485 = ssub.s32 %s36, %s43
      %p486 = scmp.eq.s32.totalorder %s485, 0
      %s488 = sadd.s32 %s487, 1
      %s489 = scalar_select %p486, %s487, %s488
      %p492 = pneg %p486
      %p493 = scmp.eq.s32.totalorder %s28, 1
      %p494 = por %p492, %p493
      %p495 = scmp.ne.s32.totalorder %s487, %s490
      %p496 = scmp.eq.s32.totalorder %s28, 0
      %p497 = por %p495, %p496
      %p498 = scmp.ne.s32.totalorder %s487, %s490
      %p499 = scmp.eq.s32.totalorder %s33, 1
      %p500 = por %p498, %p499
      %p501 = scmp.ne.s32.totalorder %s490, %s491
      %p502 = scmp.eq.s32.totalorder %s33, 0
      %p503 = por %p501, %p502
      %p504 = scmp.ne.s32.totalorder %s490, %s491
      %p505 = scmp.eq.s32.totalorder %s34, 1
      %p506 = por %p504, %p505
      %p508 = scmp.ne.s32.totalorder %s491, %s507
      %p509 = scmp.eq.s32.totalorder %s34, 0
      %p510 = por %p508, %p509
      %s511 = ssub.s32 %s36, %s43
      %p512 = scmp.eq.s32.totalorder %s511, 0
      %s514 = sadd.s32 %s513, 1
      %s515 = scalar_select %p512, %s513, %s514
      %p518 = pneg %p512
      %p519 = scmp.eq.s32.totalorder %s28, 1
      %p520 = por %p518, %p519
      %p521 = scmp.ne.s32.totalorder %s513, %s516
      %p522 = scmp.eq.s32.totalorder %s28, 0
      %p523 = por %p521, %p522
      %p524 = scmp.ne.s32.totalorder %s513, %s516
      %p525 = scmp.eq.s32.totalorder %s33, 1
      %p526 = por %p524, %p525
      %p527 = scmp.ne.s32.totalorder %s516, %s517
      %p528 = scmp.eq.s32.totalorder %s33, 0
      %p529 = por %p527, %p528
      %p530 = scmp.ne.s32.totalorder %s516, %s517
      %p531 = scmp.eq.s32.totalorder %s34, 1
      %p532 = por %p530, %p531
      %p534 = scmp.ne.s32.totalorder %s517, %s533
      %p535 = scmp.eq.s32.totalorder %s34, 0
      %p536 = por %p534, %p535
      %s537 = ssub.s32 %s35, %s47
      %p538 = scmp.eq.s32.totalorder %s537, 0
      %s540 = sadd.s32 %s539, 1
      %s541 = scalar_select %p538, %s539, %s540
      %p544 = pneg %p538
      %p545 = scmp.eq.s32.totalorder %s28, 1
      %p546 = por %p544, %p545
      %p547 = scmp.ne.s32.totalorder %s539, %s542
      %p548 = scmp.eq.s32.totalorder %s28, 0
      %p549 = por %p547, %p548
      %p550 = scmp.ne.s32.totalorder %s539, %s542
      %p551 = scmp.eq.s32.totalorder %s33, 1
      %p552 = por %p550, %p551
      %p553 = scmp.ne.s32.totalorder %s542, %s543
      %p554 = scmp.eq.s32.totalorder %s33, 0
      %p555 = por %p553, %p554
      %p556 = scmp.ne.s32.totalorder %s542, %s543
      %p557 = scmp.eq.s32.totalorder %s34, 1
      %p558 = por %p556, %p557
      %p560 = scmp.ne.s32.totalorder %s543, %s559
      %p561 = scmp.eq.s32.totalorder %s34, 0
      %p562 = por %p560, %p561
      %p563 = scmp.le.s32.totalorder 1, %s28
      %p564 = scmp.lt.s32.totalorder %s28, 3
      %p565 = pnand %p563, %p564
      %p566 = pneg %p565
      // Predicated region
      $region9: #{tpu_custom_call.1} parent=5 // pred_check
        _
      $region10: #{tpu_custom_call.1} parent=5 // pred_check_branch
        %568 = sbr.rel (%p565) target = $region12
      $region11: #{tpu_custom_call.1} parent=5 // pred_region
        %s569 = ssub.s32 %s28, 1
        // Predicated region
        $region13: #{tpu_custom_call.1} parent=11 // pred_check
          %p570 = pneg %p66
        $region14: #{tpu_custom_call.1} parent=11 // pred_check_branch
          %572 = sbr.rel (%p570) target = $region16
        $region15: #{tpu_custom_call.1} parent=11 // pred_region
          %s573 = smul.u32 2, %s37
          %s575 = ssub.s32 256, 256
          %576 = vsyncadd [#allocation4], %s575
          %s577 = smul.addr %s573, 128
          %s578 = scalar_lea.hbm %s0, %s577
          %s579 = sshll.u32 [#allocation3], 4
          %s580 = int_to_ptr.vmem [resolvable:$true] %s579
          %585 = dma.hbm_to_vmem [thread:$0]  %s578, 256, %s580, [#allocation4], 128, 128, 8
        $region16: #{tpu_custom_call.1} parent=11 // pred_fallthru
          _
        // Predicated region
        $region17: #{tpu_custom_call.1} parent=11 // pred_check
          %p586 = pneg %p87
        $region18: #{tpu_custom_call.1} parent=11 // pred_check_branch
          %588 = sbr.rel (%p586) target = $region20
        $region19: #{tpu_custom_call.1} parent=11 // pred_region
          %s590 = ssub.s32 128, 128
          %591 = vsyncadd [#allocation7], %s590
          %s593 = sshll.u32 [#allocation6], 4
          %s594 = int_to_ptr.vmem [resolvable:$true] %s593
          %596 = dma.hbm_to_vmem [thread:$0]  %s1, 128, %s594, [#allocation7]
        $region20: #{tpu_custom_call.1} parent=11 // pred_fallthru
          _
        // Predicated region
        $region21: #{tpu_custom_call.1} parent=11 // pred_check
          %p597 = pneg %p113
        $region22: #{tpu_custom_call.1} parent=11 // pred_check_branch
          %599 = sbr.rel (%p597) target = $region24
        $region23: #{tpu_custom_call.1} parent=11 // pred_region
          %s600 = smul.u32 2, %s37
          %p601 = scmp.lt.s32.totalorder %s600, 1
          %s602 = scalar_select %p601, %s600, 1
          %s603 = scalar_lea.vmem %s2, %s602
          %s604 = smul.u32 2, %s37
        $region24: #{tpu_custom_call.1} parent=11 // pred_fallthru
          _
      $region12: #{tpu_custom_call.1} parent=5 // pred_fallthru
        _
      %p605 = scmp.lt.s32.totalorder %s28, 2
      // Predicated region
      $region25: #{tpu_custom_call.1} parent=5 // pred_check
        %p606 = pneg %p605
      $region26: #{tpu_custom_call.1} parent=5 // pred_check_branch
        %608 = sbr.rel (%p606) target = $region28
      $region27: #{tpu_custom_call.1} parent=5 // pred_region
        // Predicated region
        $region29: #{tpu_custom_call.1} parent=27 // pred_check
          %p609 = pneg %p133
        $region30: #{tpu_custom_call.1} parent=27 // pred_check_branch
          %611 = sbr.rel (%p609) target = $region32
        $region31: #{tpu_custom_call.1} parent=27 // pred_region
          %p612 = scmp.lt.s32.totalorder %s36, 1
          %s613 = scalar_select %p612, %s36, 1
          %s614 = smul.addr %s613, 4
          %s615 = smul.addr %s614, 4
          %s616 = scalar_lea.vmem %s3, %s615
        $region32: #{tpu_custom_call.1} parent=27 // pred_fallthru
          _
        // Predicated region
        $region33: #{tpu_custom_call.1} parent=27 // pred_check
          %p617 = pneg %p159
        $region34: #{tpu_custom_call.1} parent=27 // pred_check_branch
          %619 = sbr.rel (%p617) target = $region36
        $region35: #{tpu_custom_call.1} parent=27 // pred_region
          %p620 = scmp.lt.s32.totalorder %s36, 1
          %s621 = scalar_select %p620, %s36, 1
          %s622 = scalar_lea.vmem %s4, %s621
        $region36: #{tpu_custom_call.1} parent=27 // pred_fallthru
          _
        // Predicated region
        $region37: #{tpu_custom_call.1} parent=27 // pred_check
          %p623 = pneg %p185
        $region38: #{tpu_custom_call.1} parent=27 // pred_check_branch
          %625 = sbr.rel (%p623) target = $region40
        $region39: #{tpu_custom_call.1} parent=27 // pred_region
          %p626 = scmp.lt.s32.totalorder %s36, 1
          %s627 = scalar_select %p626, %s36, 1
          %s628 = smul.addr %s627, 4
          %s629 = smul.addr %s628, 4
          %s630 = scalar_lea.vmem %s5, %s629
        $region40: #{tpu_custom_call.1} parent=27 // pred_fallthru
          _
        // Predicated region
        $region41: #{tpu_custom_call.1} parent=27 // pred_check
          %p631 = pneg %p211
        $region42: #{tpu_custom_call.1} parent=27 // pred_check_branch
          %633 = sbr.rel (%p631) target = $region44
        $region43: #{tpu_custom_call.1} parent=27 // pred_region
          %p634 = scmp.lt.s32.totalorder %s36, 1
          %s635 = scalar_select %p634, %s36, 1
          %s636 = scalar_lea.vmem %s6, %s635
        $region44: #{tpu_custom_call.1} parent=27 // pred_fallthru
          _
        // Predicated region
        $region45: #{tpu_custom_call.1} parent=27 // pred_check
          %p637 = pneg %p237
        $region46: #{tpu_custom_call.1} parent=27 // pred_check_branch
          %639 = sbr.rel (%p637) target = $region48
        $region47: #{tpu_custom_call.1} parent=27 // pred_region
          %p640 = scmp.lt.s32.totalorder %s36, 1
          %s641 = scalar_select %p640, %s36, 1
          %s642 = smul.addr %s641, 4
          %s643 = smul.addr %s642, 4
          %s644 = scalar_lea.vmem %s7, %s643
        $region48: #{tpu_custom_call.1} parent=27 // pred_fallthru
          _
        // Predicated region
        $region49: #{tpu_custom_call.1} parent=27 // pred_check
          %p645 = pneg %p263
        $region50: #{tpu_custom_call.1} parent=27 // pred_check_branch
          %647 = sbr.rel (%p645) target = $region52
        $region51: #{tpu_custom_call.1} parent=27 // pred_region
          %p648 = scmp.lt.s32.totalorder %s36, 1
          %s649 = scalar_select %p648, %s36, 1
          %s650 = scalar_lea.vmem %s8, %s649
        $region52: #{tpu_custom_call.1} parent=27 // pred_fallthru
          _
        // Predicated region
        $region53: #{tpu_custom_call.1} parent=27 // pred_check
          %p651 = pneg %p289
        $region54: #{tpu_custom_call.1} parent=27 // pred_check_branch
          %653 = sbr.rel (%p651) target = $region56
        $region55: #{tpu_custom_call.1} parent=27 // pred_region
          %s654 = sand.u32 %s28, 1
          %s655 = scalar_lea.sflag [#allocation4], %s654
          %s656 = sand.u32 %s279, 1
          %s657 = smul.addr %s656, 16
          %s658 = scalar_lea.vmem [#allocation8], %s657
          %s660 = ssub.s32 256, 256
          %661 = vsyncadd %s655, %s660
          %s662 = smul.addr %s36, 4
          %s663 = smul.addr %s662, 64
          %s664 = scalar_lea.hbm %s9, %s663
          %s665 = sshll.u32 %s658, 4
          %s666 = int_to_ptr.vmem [resolvable:$true] %s665
          %671 = dma.hbm_to_vmem [thread:$0]  %s664, 256, %s666, %s655, 64, 64, 4
        $region56: #{tpu_custom_call.1} parent=27 // pred_fallthru
          _
        // Predicated region
        $region57: #{tpu_custom_call.1} parent=27 // pred_check
          %p672 = pneg %p315
        $region58: #{tpu_custom_call.1} parent=27 // pred_check_branch
          %674 = sbr.rel (%p672) target = $region60
        $region59: #{tpu_custom_call.1} parent=27 // pred_region
          %p675 = scmp.lt.s32.totalorder %s36, 1
          %s676 = scalar_select %p675, %s36, 1
          %s677 = scalar_lea.vmem %s10, %s676
        $region60: #{tpu_custom_call.1} parent=27 // pred_fallthru
          _
        // Predicated region
        $region61: #{tpu_custom_call.1} parent=27 // pred_check
          %p678 = pneg %p341
        $region62: #{tpu_custom_call.1} parent=27 // pred_check_branch
          %680 = sbr.rel (%p678) target = $region64
        $region63: #{tpu_custom_call.1} parent=27 // pred_region
          %p681 = scmp.lt.s32.totalorder %s36, 1
          %s682 = scalar_select %p681, %s36, 1
          %s683 = scalar_lea.vmem %s11, %s682
        $region64: #{tpu_custom_call.1} parent=27 // pred_fallthru
          _
        // Predicated region
        $region65: #{tpu_custom_call.1} parent=27 // pred_check
          %p684 = pneg %p367
        $region66: #{tpu_custom_call.1} parent=27 // pred_check_branch
          %686 = sbr.rel (%p684) target = $region68
        $region67: #{tpu_custom_call.1} parent=27 // pred_region
          %p687 = scmp.lt.s32.totalorder %s36, 1
          %s688 = scalar_select %p687, %s36, 1
          %s689 = scalar_lea.vmem %s12, %s688
        $region68: #{tpu_custom_call.1} parent=27 // pred_fallthru
          _
        // Predicated region
        $region69: #{tpu_custom_call.1} parent=27 // pred_check
          %p690 = pneg %p393
        $region70: #{tpu_custom_call.1} parent=27 // pred_check_branch
          %692 = sbr.rel (%p690) target = $region72
        $region71: #{tpu_custom_call.1} parent=27 // pred_region
          %s693 = sand.u32 %s28, 1
          %s694 = scalar_lea.sflag [#allocation4], %s693
          %s695 = sand.u32 %s383, 1
          %s696 = smul.addr %s695, 16
          %s697 = scalar_lea.vmem [#allocation9], %s696
          %s699 = ssub.s32 256, 256
          %700 = vsyncadd %s694, %s699
          %s701 = smul.addr %s36, 4
          %s702 = smul.addr %s701, 64
          %s703 = scalar_lea.hbm %s13, %s702
          %s704 = sshll.u32 %s697, 4
          %s705 = int_to_ptr.vmem [resolvable:$true] %s704
          %710 = dma.hbm_to_vmem [thread:$0]  %s703, 256, %s705, %s694, 64, 64, 4
        $region72: #{tpu_custom_call.1} parent=27 // pred_fallthru
          _
        // Predicated region
        $region73: #{tpu_custom_call.1} parent=27 // pred_check
          %p711 = pneg %p419
        $region74: #{tpu_custom_call.1} parent=27 // pred_check_branch
          %713 = sbr.rel (%p711) target = $region76
        $region75: #{tpu_custom_call.1} parent=27 // pred_region
          %p714 = scmp.lt.s32.totalorder %s36, 1
          %s715 = scalar_select %p714, %s36, 1
          %s716 = scalar_lea.vmem %s14, %s715
        $region76: #{tpu_custom_call.1} parent=27 // pred_fallthru
          _
        // Predicated region
        $region77: #{tpu_custom_call.1} parent=27 // pred_check
          %p717 = pneg %p445
        $region78: #{tpu_custom_call.1} parent=27 // pred_check_branch
          %719 = sbr.rel (%p717) target = $region80
        $region79: #{tpu_custom_call.1} parent=27 // pred_region
          %p720 = scmp.lt.s32.totalorder %s36, 1
          %s721 = scalar_select %p720, %s36, 1
          %s722 = smul.addr %s721, 8
          %s723 = smul.addr %s722, 4
          %s724 = scalar_lea.vmem %s15, %s723
        $region80: #{tpu_custom_call.1} parent=27 // pred_fallthru
          _
        // Predicated region
        $region81: #{tpu_custom_call.1} parent=27 // pred_check
          %p725 = pneg %p471
        $region82: #{tpu_custom_call.1} parent=27 // pred_check_branch
          %727 = sbr.rel (%p725) target = $region84
        $region83: #{tpu_custom_call.1} parent=27 // pred_region
          %p728 = scmp.lt.s32.totalorder %s36, 1
          %s729 = scalar_select %p728, %s36, 1
          %s730 = scalar_lea.vmem %s16, %s729
        $region84: #{tpu_custom_call.1} parent=27 // pred_fallthru
          _
        // Predicated region
        $region85: #{tpu_custom_call.1} parent=27 // pred_check
          %p731 = pneg %p497
        $region86: #{tpu_custom_call.1} parent=27 // pred_check_branch
          %733 = sbr.rel (%p731) target = $region88
        $region87: #{tpu_custom_call.1} parent=27 // pred_region
          %p734 = scmp.lt.s32.totalorder %s36, 1
          %s735 = scalar_select %p734, %s36, 1
          %s736 = scalar_lea.vmem %s17, %s735
        $region88: #{tpu_custom_call.1} parent=27 // pred_fallthru
          _
        // Predicated region
        $region89: #{tpu_custom_call.1} parent=27 // pred_check
          %p737 = pneg %p523
        $region90: #{tpu_custom_call.1} parent=27 // pred_check_branch
          %739 = sbr.rel (%p737) target = $region92
        $region91: #{tpu_custom_call.1} parent=27 // pred_region
          %p740 = scmp.lt.s32.totalorder %s36, 1
          %s741 = scalar_select %p740, %s36, 1
          %s742 = scalar_lea.vmem %s18, %s741
        $region92: #{tpu_custom_call.1} parent=27 // pred_fallthru
          _
      $region28: #{tpu_custom_call.1} parent=5 // pred_fallthru
        _
      %p743 = scmp.le.s32.totalorder 1, %s28
      %p744 = scmp.lt.s32.totalorder %s28, 3
      %p745 = pnand %p743, %p744
      %p746 = pneg %p745
      // Predicated region
      $region93: #{tpu_custom_call.1} parent=5 // pred_check
        _
      $region94: #{tpu_custom_call.1} parent=5 // pred_check_branch
        %748 = sbr.rel (%p745) target = $region96
      $region95: #{tpu_custom_call.1} parent=5 // pred_region
        %s749 = ssub.s32 %s28, 1
        // Predicated region
        $region97: #{tpu_custom_call.1} parent=95 // pred_check
          %p750 = pneg %p66
        $region98: #{tpu_custom_call.1} parent=95 // pred_check_branch
          %752 = sbr.rel (%p750) target = $region100
        $region99: #{tpu_custom_call.1} parent=95 // pred_region
          %753 = dma.done [#allocation4], 256
        $region100: #{tpu_custom_call.1} parent=95 // pred_fallthru
          _
        // Predicated region
        $region101: #{tpu_custom_call.1} parent=95 // pred_check
          %p754 = pneg %p87
        $region102: #{tpu_custom_call.1} parent=95 // pred_check_branch
          %756 = sbr.rel (%p754) target = $region104
        $region103: #{tpu_custom_call.1} parent=95 // pred_region
          %757 = dma.done [#allocation7], 128
        $region104: #{tpu_custom_call.1} parent=95 // pred_fallthru
          _
        %s758 = sand.u32 %s33, 1
        %s759 = scalar_lea.sflag [#allocation4], %s758
        %s760 = sand.u32 %s282, 1
        %s761 = smul.addr %s760, 16
        %s762 = scalar_lea.vmem [#allocation8], %s761
        // Predicated region
        $region105: #{tpu_custom_call.1} parent=95 // pred_check
          %p763 = pneg %p295
        $region106: #{tpu_custom_call.1} parent=95 // pred_check_branch
          %765 = sbr.rel (%p763) target = $region108
        $region107: #{tpu_custom_call.1} parent=95 // pred_region
          %766 = dma.done %s759, 256
        $region108: #{tpu_custom_call.1} parent=95 // pred_fallthru
          _
        %s767 = sand.u32 %s33, 1
        %s768 = scalar_lea.sflag [#allocation4], %s767
        %s769 = sand.u32 %s386, 1
        %s770 = smul.addr %s769, 16
        %s771 = scalar_lea.vmem [#allocation9], %s770
        // Predicated region
        $region109: #{tpu_custom_call.1} parent=95 // pred_check
          %p772 = pneg %p399
        $region110: #{tpu_custom_call.1} parent=95 // pred_check_branch
          %774 = sbr.rel (%p772) target = $region112
        $region111: #{tpu_custom_call.1} parent=95 // pred_region
          %775 = dma.done %s768, 256
        $region112: #{tpu_custom_call.1} parent=95 // pred_fallthru
          _
        %p776 = pneg %p66
        %p777 = pneg %p63
        %p778 = pneg %p87
        %p779 = pneg %p84
        %s780 = smul.u32 2, %s37
        %p781 = scmp.lt.s32.totalorder %s780, 1
        %s782 = scalar_select %p781, %s780, 1
        %s783 = scalar_lea.vmem %s2, %s782
        %p784 = pneg %p113
        %p785 = pneg %p110
        %p786 = scmp.lt.s32.totalorder %s38, 1
        %s787 = scalar_select %p786, %s38, 1
        %s788 = smul.addr %s787, 4
        %s789 = smul.addr %s788, 4
        %s790 = scalar_lea.vmem %s3, %s789
        %p791 = pneg %p139
        %p792 = pneg %p136
        %p793 = scmp.lt.s32.totalorder %s38, 1
        %s794 = scalar_select %p793, %s38, 1
        %s795 = scalar_lea.vmem %s4, %s794
        %p796 = pneg %p165
        %p797 = pneg %p162
        %p798 = scmp.lt.s32.totalorder %s38, 1
        %s799 = scalar_select %p798, %s38, 1
        %s800 = smul.addr %s799, 4
        %s801 = smul.addr %s800, 4
        %s802 = scalar_lea.vmem %s5, %s801
        %p803 = pneg %p191
        %p804 = pneg %p188
        %p805 = scmp.lt.s32.totalorder %s38, 1
        %s806 = scalar_select %p805, %s38, 1
        %s807 = scalar_lea.vmem %s6, %s806
        %p808 = pneg %p217
        %p809 = pneg %p214
        %p810 = scmp.lt.s32.totalorder %s38, 1
        %s811 = scalar_select %p810, %s38, 1
        %s812 = smul.addr %s811, 4
        %s813 = smul.addr %s812, 4
        %s814 = scalar_lea.vmem %s7, %s813
        %p815 = pneg %p243
        %p816 = pneg %p240
        %p817 = scmp.lt.s32.totalorder %s38, 1
        %s818 = scalar_select %p817, %s38, 1
        %s819 = scalar_lea.vmem %s8, %s818
        %p820 = pneg %p269
        %p821 = pneg %p266
        %s822 = sand.u32 %s33, 1
        %s823 = scalar_lea.sflag [#allocation4], %s822
        %s824 = sand.u32 %s282, 1
        %s825 = smul.addr %s824, 16
        %s826 = scalar_lea.vmem [#allocation8], %s825
        %p827 = pneg %p295
        %p828 = pneg %p292
        %p829 = scmp.lt.s32.totalorder %s38, 1
        %s830 = scalar_select %p829, %s38, 1
        %s831 = scalar_lea.vmem %s10, %s830
        %p832 = pneg %p321
        %p833 = pneg %p318
        %p834 = scmp.lt.s32.totalorder %s38, 1
        %s835 = scalar_select %p834, %s38, 1
        %s836 = scalar_lea.vmem %s11, %s835
        %p837 = pneg %p347
        %p838 = pneg %p344
        %p839 = scmp.lt.s32.totalorder %s38, 1
        %s840 = scalar_select %p839, %s38, 1
        %s841 = scalar_lea.vmem %s12, %s840
        %p842 = pneg %p373
        %p843 = pneg %p370
        %s844 = sand.u32 %s33, 1
        %s845 = scalar_lea.sflag [#allocation4], %s844
        %s846 = sand.u32 %s386, 1
        %s847 = smul.addr %s846, 16
        %s848 = scalar_lea.vmem [#allocation9], %s847
        %p849 = pneg %p399
        %p850 = pneg %p396
        %p851 = scmp.lt.s32.totalorder %s38, 1
        %s852 = scalar_select %p851, %s38, 1
        %s853 = scalar_lea.vmem %s14, %s852
        %p854 = pneg %p425
        %p855 = pneg %p422
        %p856 = scmp.lt.s32.totalorder %s38, 1
        %s857 = scalar_select %p856, %s38, 1
        %s858 = smul.addr %s857, 8
        %s859 = smul.addr %s858, 4
        %s860 = scalar_lea.vmem %s15, %s859
        %p861 = pneg %p451
        %p862 = pneg %p448
        %p863 = scmp.lt.s32.totalorder %s38, 1
        %s864 = scalar_select %p863, %s38, 1
        %s865 = scalar_lea.vmem %s16, %s864
        %p866 = pneg %p477
        %p867 = pneg %p474
        %p868 = scmp.lt.s32.totalorder %s38, 1
        %s869 = scalar_select %p868, %s38, 1
        %s870 = scalar_lea.vmem %s17, %s869
        %p871 = pneg %p503
        %p872 = pneg %p500
        %p873 = scmp.lt.s32.totalorder %s38, 1
        %s874 = scalar_select %p873, %s38, 1
        %s875 = scalar_lea.vmem %s18, %s874
        %p876 = pneg %p529
        %p877 = pneg %p526
        %p878 = pneg %p555
        %p879 = pneg %p552
        %s880 = smul.u32 2, %s37
        %s881 = smul.u32 2, %s37
        %p882 = scmp.lt.s32.totalorder %s881, 1
        %s883 = scalar_select %p882, %s881, 1
        %s884 = scalar_lea.vmem %s2, %s883
        %s885 = smul.u32 2, %s37
        %p886 = scmp.lt.s32.totalorder %s38, 1
        %s887 = scalar_select %p886, %s38, 1
        %s888 = smul.addr %s887, 4
        %s889 = smul.addr %s888, 4
        %s890 = scalar_lea.vmem %s3, %s889
        %p891 = scmp.lt.s32.totalorder %s38, 1
        %s892 = scalar_select %p891, %s38, 1
        %s893 = scalar_lea.vmem %s4, %s892
        %p894 = scmp.lt.s32.totalorder %s38, 1
        %s895 = scalar_select %p894, %s38, 1
        %s896 = smul.addr %s895, 4
        %s897 = smul.addr %s896, 4
        %s898 = scalar_lea.vmem %s5, %s897
        %p899 = scmp.lt.s32.totalorder %s38, 1
        %s900 = scalar_select %p899, %s38, 1
        %s901 = scalar_lea.vmem %s6, %s900
        %p902 = scmp.lt.s32.totalorder %s38, 1
        %s903 = scalar_select %p902, %s38, 1
        %s904 = smul.addr %s903, 4
        %s905 = smul.addr %s904, 4
        %s906 = scalar_lea.vmem %s7, %s905
        %p907 = scmp.lt.s32.totalorder %s38, 1
        %s908 = scalar_select %p907, %s38, 1
        %s909 = scalar_lea.vmem %s8, %s908
        %p910 = scmp.lt.s32.totalorder %s38, 1
        %s911 = scalar_select %p910, %s38, 1
        %s912 = scalar_lea.vmem %s10, %s911
        %p913 = scmp.lt.s32.totalorder %s38, 1
        %s914 = scalar_select %p913, %s38, 1
        %s915 = scalar_lea.vmem %s11, %s914
        %p916 = scmp.lt.s32.totalorder %s38, 1
        %s917 = scalar_select %p916, %s38, 1
        %s918 = scalar_lea.vmem %s12, %s917
        %p919 = scmp.lt.s32.totalorder %s38, 1
        %s920 = scalar_select %p919, %s38, 1
        %s921 = scalar_lea.vmem %s14, %s920
        %p922 = scmp.lt.s32.totalorder %s38, 1
        %s923 = scalar_select %p922, %s38, 1
        %s924 = smul.addr %s923, 8
        %s925 = smul.addr %s924, 4
        %s926 = scalar_lea.vmem %s15, %s925
        %p927 = scmp.lt.s32.totalorder %s38, 1
        %s928 = scalar_select %p927, %s38, 1
        %s929 = scalar_lea.vmem %s16, %s928
        %p930 = scmp.lt.s32.totalorder %s38, 1
        %s931 = scalar_select %p930, %s38, 1
        %s932 = scalar_lea.vmem %s17, %s931
        %p933 = scmp.lt.s32.totalorder %s38, 1
        %s934 = scalar_select %p933, %s38, 1
        %s935 = scalar_lea.vmem %s18, %s934
        %s936 = smul.u32 2, %s37
        %p938 = scmp.eq.s32.totalorder %s38, 0
        // Predicated region
        $region113: #{tpu_custom_call.1} parent=95 // pred_check
          %p939 = pneg %p938
        $region114: #{tpu_custom_call.1} parent=95 // pred_check_branch
          %941 = sbr.rel (%p939) target = $region116
        $region115: #{tpu_custom_call.1} parent=95 // pred_region
          %v942 = vld [vmem:[#allocation3] sm:$0xff]
          %v943 = vld [vmem:[#allocation3 + $0x8] sm:$0xff]
          %v944 = vmul.f32 %v942, 5.656854
          %v945 = vmul.f32 %v943, 5.656854
          %v946 = vld [vmem:[#allocation6] sm:$0xff]
          %v947 = vadd.f32 %v944, %v946
          %v948 = vadd.f32 %v945, %v946
          %vm949 = vcmask 261120
          %950 = vst.msk [vmem:[#allocation2] sm:$0xff] %vm949, %v947
          %951 = vst.msk [vmem:[#allocation2 + $0x8] sm:$0xff] %vm949, %v948
        $region116: #{tpu_custom_call.1} parent=95 // pred_fallthru
          _
        %v952 = vld [vmem:[%s884] sm:$0x1]
        %v953 = vld [vmem:[%s884 + $0x1] sm:$0x1]
        %vm954 = vcmp.eq.f32.partialorder %v952, 0.0
        %vm955 = vcmp.eq.f32.partialorder %v953, 0.0
        %v956 = vsel %vm954, -1e+10, 0.0
        %v957 = vsel %vm955, -1e+10, 0.0
        %v958 = vld [vmem:[#allocation2] sm:$0xff]
        %v959 = vld [vmem:[#allocation2 + $0x8] sm:$0xff]
        %v960 = vld [vmem:[%s890] sm:$0xf]
        %v961 = vld [vmem:[%s890 + $0x4] sm:$0xf]
        %v962 = vld [vmem:[%s890 + $0x8] sm:$0xf]
        %v963 = vld [vmem:[%s890 + $0xc] sm:$0xf]
        %v964 = vld [vmem:[%s893] sm:$0x1]
        %v965 = vld [vmem:[%s898] sm:$0xf]
        %v966 = vld [vmem:[%s898 + $0x4] sm:$0xf]
        %v967 = vld [vmem:[%s898 + $0x8] sm:$0xf]
        %v968 = vld [vmem:[%s898 + $0xc] sm:$0xf]
        %v969 = vld [vmem:[%s901] sm:$0x1]
        %v970 = vld [vmem:[%s906] sm:$0xf]
        %v971 = vld [vmem:[%s906 + $0x4] sm:$0xf]
        %v972 = vld [vmem:[%s906 + $0x8] sm:$0xf]
        %v973 = vld [vmem:[%s906 + $0xc] sm:$0xf]
        %v974 = vld [vmem:[%s909] sm:$0x1]
        %v975 = vld [vmem:[%s762] sm:$0xf]
        %v976 = vld [vmem:[%s762 + $0x4] sm:$0xf]
        %v977 = vld [vmem:[%s762 + $0x8] sm:$0xf]
        %v978 = vld [vmem:[%s762 + $0xc] sm:$0xf]
        %v979 = vld [vmem:[%s912] sm:$0x1]
        %v980 = vld [vmem:[%s915] sm:$0x1]
        %v981 = vld [vmem:[%s918] sm:$0x1]
        %v982 = vld [vmem:[%s771] sm:$0xf]
        %v983 = vld [vmem:[%s771 + $0x4] sm:$0xf]
        %v984 = vld [vmem:[%s771 + $0x8] sm:$0xf]
        %v985 = vld [vmem:[%s771 + $0xc] sm:$0xf]
        %v986 = vld [vmem:[%s921] sm:$0x1]
        %v987 = vld [vmem:[%s926] sm:$0xf]
        %v988 = vld [vmem:[%s926 + $0x4] sm:$0xf]
        %v989 = vld [vmem:[%s926 + $0x8] sm:$0xf]
        %v990 = vld [vmem:[%s926 + $0xc] sm:$0xf]
        %v991 = vld [vmem:[%s926 + $0x10] sm:$0xf]
        %v992 = vld [vmem:[%s926 + $0x14] sm:$0xf]
        %v993 = vld [vmem:[%s926 + $0x18] sm:$0xf]
        %v994 = vld [vmem:[%s926 + $0x1c] sm:$0xf]
        %v995 = vld [vmem:[%s929] sm:$0x1]
        %v996 = vld [vmem:[%s932] sm:$0x1]
        %v997 = vld [vmem:[%s935] sm:$0x1]
        %v998 = vpack.c.bf16 %v959, %v958
        %v1000 = vlaneseq
        %v1001 = vshrl.u32 %v1000, 7
        %v1002 = vsub.s32 0, %v1001
        %v1003 = vrot.slane %v964, %v1002
        %v1009 = vunpack.c.l.b16 %v960
        %v1010 = vunpack.c.l.b16 %v961
        %v1011 = vunpack.c.l.b16 %v962
        %v1012 = vunpack.c.l.b16 %v963
        %v1013 = vpack.c.b16 %v1010, %v1009
        %v1014 = vpack.c.b16 %v1012, %v1011
        %vm1017 = vcmask 261120
        %v1019 = vsel %vm1017, %v998, 0
        %1021 = vmatprep.subr.bf16.mxu0 0
        %1022 = vmatpush1.bf16.msra.mxu0 %v1013
        %1023 = vmatprep.subr.bf16.mxu0 0
        %1024 = vmatpush1.bf16.msra.mxu0 %v1014
        %1025 = vmatprep.subr.bf16.mxu0 0
        %1026 = vmatpush1.bf16.msra.mxu0 0
        %1027 = vmatprep.subr.bf16.mxu0 0
        %1028 = vmatpush1.bf16.msra.mxu0 0
        %1029 = vmatprep.subr.bf16.mxu0 0
        %1030 = vmatpush1.bf16.msra.mxu0 0
        %1031 = vmatprep.subr.bf16.mxu0 0
        %1032 = vmatpush1.bf16.msra.mxu0 0
        %1033 = vmatprep.subr.bf16.mxu0 0
        %1034 = vmatpush1.bf16.msra.mxu0 0
        %1035 = vmatprep.subr.bf16.mxu0 0
        %1036 = vmatpush1.bf16.msra.mxu0 0
        %1037 = vmatprep.subr.bf16.mxu0 0
        %1038 = vmatpush1.bf16.msra.mxu0 0
        %1039 = vmatprep.subr.bf16.mxu0 0
        %1040 = vmatpush1.bf16.msra.mxu0 0
        %1041 = vmatprep.subr.bf16.mxu0 0
        %1042 = vmatpush1.bf16.msra.mxu0 0
        %1043 = vmatprep.subr.bf16.mxu0 0
        %1044 = vmatpush1.bf16.msra.mxu0 0
        %1045 = vmatprep.subr.bf16.mxu0 0
        %1046 = vmatpush1.bf16.msra.mxu0 0
        %1047 = vmatprep.subr.bf16.mxu0 0
        %1048 = vmatpush1.bf16.msra.mxu0 0
        %1049 = vmatprep.subr.bf16.mxu0 0
        %1050 = vmatpush1.bf16.msra.mxu0 0
        %1051 = vmatprep.subr.bf16.mxu0 0
        %1052 = vmatpush1.bf16.msra.mxu0 0
        %1053 = vmatprep.mubr.bf16.mxu0 0
        %1054 = vmatmul.mubr.bf16.gmra.mrb[0].mxu0 %v1019
        %v1055 = vpop.f32.mrb[0].mxu0
        %v1056 = vadd.f32 %v1003, %v1055
        %v1057 = vpop.f32.mrb[0].mxu0
        %v1058 = vpop.f32.mrb[0].mxu0
        %v1059 = vadd.f32 %v1003, %v1058
        %v1060 = vpop.f32.mrb[0].mxu0
        %1061 = vdwg.mxu0
        %v1063 = vlaneseq
        %v1064 = vshrl.u32 %v1063, 7
        %v1065 = vsub.s32 0, %v1064
        %v1066 = vrot.slane %v969, %v1065
        %v1072 = vunpack.c.l.b16 %v965
        %v1073 = vunpack.c.l.b16 %v966
        %v1074 = vunpack.c.l.b16 %v967
        %v1075 = vunpack.c.l.b16 %v968
        %v1076 = vpack.c.b16 %v1073, %v1072
        %v1077 = vpack.c.b16 %v1075, %v1074
        %1080 = vmatprep.subr.bf16.mxu0 0
        %1081 = vmatpush1.bf16.msra.mxu0 %v1076
        %1082 = vmatprep.subr.bf16.mxu0 0
        %1083 = vmatpush1.bf16.msra.mxu0 %v1077
        %1084 = vmatprep.subr.bf16.mxu0 0
        %1085 = vmatpush1.bf16.msra.mxu0 0
        %1086 = vmatprep.subr.bf16.mxu0 0
        %1087 = vmatpush1.bf16.msra.mxu0 0
        %1088 = vmatprep.subr.bf16.mxu0 0
        %1089 = vmatpush1.bf16.msra.mxu0 0
        %1090 = vmatprep.subr.bf16.mxu0 0
        %1091 = vmatpush1.bf16.msra.mxu0 0
        %1092 = vmatprep.subr.bf16.mxu0 0
        %1093 = vmatpush1.bf16.msra.mxu0 0
        %1094 = vmatprep.subr.bf16.mxu0 0
        %1095 = vmatpush1.bf16.msra.mxu0 0
        %1096 = vmatprep.subr.bf16.mxu0 0
        %1097 = vmatpush1.bf16.msra.mxu0 0
        %1098 = vmatprep.subr.bf16.mxu0 0
        %1099 = vmatpush1.bf16.msra.mxu0 0
        %1100 = vmatprep.subr.bf16.mxu0 0
        %1101 = vmatpush1.bf16.msra.mxu0 0
        %1102 = vmatprep.subr.bf16.mxu0 0
        %1103 = vmatpush1.bf16.msra.mxu0 0
        %1104 = vmatprep.subr.bf16.mxu0 0
        %1105 = vmatpush1.bf16.msra.mxu0 0
        %1106 = vmatprep.subr.bf16.mxu0 0
        %1107 = vmatpush1.bf16.msra.mxu0 0
        %1108 = vmatprep.subr.bf16.mxu0 0
        %1109 = vmatpush1.bf16.msra.mxu0 0
        %1110 = vmatprep.subr.bf16.mxu0 0
        %1111 = vmatpush1.bf16.msra.mxu0 0
        %1112 = vmatprep.mubr.bf16.mxu0 0
        %1113 = vmatmul.mubr.bf16.gmra.mrb[0].mxu0 %v1019
        %v1114 = vpop.f32.mrb[0].mxu0
        %v1115 = vadd.f32 %v1066, %v1114
        %v1116 = vpop.f32.mrb[0].mxu0
        %v1117 = vpop.f32.mrb[0].mxu0
        %v1118 = vadd.f32 %v1066, %v1117
        %v1119 = vpop.f32.mrb[0].mxu0
        %1120 = vdwg.mxu0
        %v1122 = vlaneseq
        %v1123 = vshrl.u32 %v1122, 7
        %v1124 = vsub.s32 0, %v1123
        %v1125 = vrot.slane %v974, %v1124
        %v1131 = vunpack.c.l.b16 %v970
        %v1132 = vunpack.c.l.b16 %v971
        %v1133 = vunpack.c.l.b16 %v972
        %v1134 = vunpack.c.l.b16 %v973
        %v1135 = vpack.c.b16 %v1132, %v1131
        %v1136 = vpack.c.b16 %v1134, %v1133
        %1139 = vmatprep.subr.bf16.mxu0 0
        %1140 = vmatpush1.bf16.msra.mxu0 %v1135
        %1141 = vmatprep.subr.bf16.mxu0 0
        %1142 = vmatpush1.bf16.msra.mxu0 %v1136
        %1143 = vmatprep.subr.bf16.mxu0 0
        %1144 = vmatpush1.bf16.msra.mxu0 0
        %1145 = vmatprep.subr.bf16.mxu0 0
        %1146 = vmatpush1.bf16.msra.mxu0 0
        %1147 = vmatprep.subr.bf16.mxu0 0
        %1148 = vmatpush1.bf16.msra.mxu0 0
        %1149 = vmatprep.subr.bf16.mxu0 0
        %1150 = vmatpush1.bf16.msra.mxu0 0
        %1151 = vmatprep.subr.bf16.mxu0 0
        %1152 = vmatpush1.bf16.msra.mxu0 0
        %1153 = vmatprep.subr.bf16.mxu0 0
        %1154 = vmatpush1.bf16.msra.mxu0 0
        %1155 = vmatprep.subr.bf16.mxu0 0
        %1156 = vmatpush1.bf16.msra.mxu0 0
        %1157 = vmatprep.subr.bf16.mxu0 0
        %1158 = vmatpush1.bf16.msra.mxu0 0
        %1159 = vmatprep.subr.bf16.mxu0 0
        %1160 = vmatpush1.bf16.msra.mxu0 0
        %1161 = vmatprep.subr.bf16.mxu0 0
        %1162 = vmatpush1.bf16.msra.mxu0 0
        %1163 = vmatprep.subr.bf16.mxu0 0
        %1164 = vmatpush1.bf16.msra.mxu0 0
        %1165 = vmatprep.subr.bf16.mxu0 0
        %1166 = vmatpush1.bf16.msra.mxu0 0
        %1167 = vmatprep.subr.bf16.mxu0 0
        %1168 = vmatpush1.bf16.msra.mxu0 0
        %1169 = vmatprep.subr.bf16.mxu0 0
        %1170 = vmatpush1.bf16.msra.mxu0 0
        %1171 = vmatprep.mubr.bf16.mxu0 0
        %1172 = vmatmul.mubr.bf16.gmra.mrb[0].mxu0 %v1019
        %v1173 = vpop.f32.mrb[0].mxu0
        %v1174 = vadd.f32 %v1125, %v1173
        %v1175 = vpop.f32.mrb[0].mxu0
        %v1176 = vpop.f32.mrb[0].mxu0
        %v1177 = vadd.f32 %v1125, %v1176
        %v1178 = vpop.f32.mrb[0].mxu0
        %1179 = vdwg.mxu0
        %v1180 = vpack.c.bf16 %v1059, %v1056
        %v1182 = vunpack.c.l.b16 %v1180
        %v1183 = vunpack.c.h.b16 %v1180
        %v1184 = vpack.c.b16 %v1182, %v1182
        %v1185 = vpack.c.b16 %v1183, %v1183
        %v1186 = vpack.c.bf16 %v1118, %v1115
        %v1188 = vunpack.c.l.b16 %v1186
        %v1189 = vunpack.c.h.b16 %v1186
        %v1190 = vpack.c.b16 %v1188, %v1188
        %v1191 = vpack.c.b16 %v1189, %v1189
        %v1192 = vpack.c.bf16 %v1177, %v1174
        %v1194 = vunpack.c.l.b16 %v1192
        %v1195 = vunpack.c.h.b16 %v1192
        %v1196 = vpack.c.b16 %v1194, %v1194
        %v1197 = vpack.c.b16 %v1195, %v1195
        %1198 = vrot.lane.b32.xlu0 %v1184, 120
        %v1199 = vpop.permute.xlu0 %1198
        %1200 = vrot.lane.b32.xlu0 %v1185, 120
        %v1201 = vpop.permute.xlu0 %1200
        %1202 = vrot.lane.b32.xlu0 %v1184, 112
        %v1203 = vpop.permute.xlu0 %1202
        %1204 = vrot.lane.b32.xlu0 %v1185, 112
        %v1205 = vpop.permute.xlu0 %1204
        %1206 = vrot.lane.b32.xlu0 %v1184, 104
        %v1207 = vpop.permute.xlu0 %1206
        %1208 = vrot.lane.b32.xlu0 %v1185, 104
        %v1209 = vpop.permute.xlu0 %1208
        %1210 = vrot.lane.b32.xlu0 %v1190, 120
        %v1211 = vpop.permute.xlu0 %1210
        %1212 = vrot.lane.b32.xlu0 %v1191, 120
        %v1213 = vpop.permute.xlu0 %1212
        %1214 = vrot.lane.b32.xlu0 %v1190, 112
        %v1215 = vpop.permute.xlu0 %1214
        %1216 = vrot.lane.b32.xlu0 %v1191, 112
        %v1217 = vpop.permute.xlu0 %1216
        %1218 = vrot.lane.b32.xlu0 %v1190, 104
        %v1219 = vpop.permute.xlu0 %1218
        %1220 = vrot.lane.b32.xlu0 %v1191, 104
        %v1221 = vpop.permute.xlu0 %1220
        %1222 = vrot.lane.b32.xlu0 %v1196, 120
        %v1223 = vpop.permute.xlu0 %1222
        %1224 = vrot.lane.b32.xlu0 %v1197, 120
        %v1225 = vpop.permute.xlu0 %1224
        %1226 = vrot.lane.b32.xlu0 %v1196, 112
        %v1227 = vpop.permute.xlu0 %1226
        %1228 = vrot.lane.b32.xlu0 %v1197, 112
        %v1229 = vpop.permute.xlu0 %1228
        %1230 = vrot.lane.b32.xlu0 %v1196, 104
        %v1231 = vpop.permute.xlu0 %1230
        %1232 = vrot.lane.b32.xlu0 %v1197, 104
        %v1233 = vpop.permute.xlu0 %1232
        %vm1234 = vcmask 64512
        %v1236 = vsel %vm1234, %v1184, 0
        %v1239 = vsel %vm1234, %v1190, 0
        %1241 = vmatprep.subr.bf16.mxu0 0
        %1242 = vmatpush1.bf16.xpose.msra.mxu0 %v1239
        %1243 = vmatprep.subr.bf16.mxu0 0
        %1244 = vmatpush1.bf16.xpose.msra.mxu0 0
        %1245 = vmatprep.subr.bf16.mxu0 0
        %1246 = vmatpush1.bf16.xpose.msra.mxu0 0
        %1247 = vmatprep.subr.bf16.mxu0 0
        %1248 = vmatpush1.bf16.xpose.msra.mxu0 0
        %1249 = vmatprep.subr.bf16.mxu0 0
        %1250 = vmatpush1.bf16.xpose.msra.mxu0 0
        %1251 = vmatprep.subr.bf16.mxu0 0
        %1252 = vmatpush1.bf16.xpose.msra.mxu0 0
        %1253 = vmatprep.subr.bf16.mxu0 0
        %1254 = vmatpush1.bf16.xpose.msra.mxu0 0
        %1255 = vmatprep.subr.bf16.mxu0 0
        %1256 = vmatpush1.bf16.xpose.msra.mxu0 0
        %1257 = vmatprep.subr.bf16.mxu0 0
        %1258 = vmatpush1.bf16.xpose.msra.mxu0 0
        %1259 = vmatprep.subr.bf16.mxu0 0
        %1260 = vmatpush1.bf16.xpose.msra.mxu0 0
        %1261 = vmatprep.subr.bf16.mxu0 0
        %1262 = vmatpush1.bf16.xpose.msra.mxu0 0
        %1263 = vmatprep.subr.bf16.mxu0 0
        %1264 = vmatpush1.bf16.xpose.msra.mxu0 0
        %1265 = vmatprep.subr.bf16.mxu0 0
        %1266 = vmatpush1.bf16.xpose.msra.mxu0 0
        %1267 = vmatprep.subr.bf16.mxu0 0
        %1268 = vmatpush1.bf16.xpose.msra.mxu0 0
        %1269 = vmatprep.subr.bf16.mxu0 0
        %1270 = vmatpush1.bf16.xpose.msra.mxu0 0
        %1271 = vmatprep.subr.bf16.mxu0 0
        %1272 = vmatpush1.bf16.xpose.msra.mxu0 0
        %1273 = vmatprep.mubr.bf16.mxu0 0
        %1274 = vmatmul.mubr.bf16.gmra.mrb[0].mxu0 %v1236
        %v1275 = vpop.f32.mrb[0].mxu0
        %v1276 = vadd.f32 0.0, %v1275
        %v1277 = vpop.f32.mrb[0].mxu0
        %v1278 = vpop.f32.mrb[0].mxu0
        %v1279 = vpop.f32.mrb[0].mxu0
        %1280 = vdwg.mxu0
        %v1282 = vsel %vm1234, %v1185, 0
        %v1285 = vsel %vm1234, %v1191, 0
        %1287 = vmatprep.subr.bf16.mxu0 0
        %1288 = vmatpush1.bf16.xpose.msra.mxu0 %v1285
        %1289 = vmatprep.subr.bf16.mxu0 0
        %1290 = vmatpush1.bf16.xpose.msra.mxu0 0
        %1291 = vmatprep.subr.bf16.mxu0 0
        %1292 = vmatpush1.bf16.xpose.msra.mxu0 0
        %1293 = vmatprep.subr.bf16.mxu0 0
        %1294 = vmatpush1.bf16.xpose.msra.mxu0 0
        %1295 = vmatprep.subr.bf16.mxu0 0
        %1296 = vmatpush1.bf16.xpose.msra.mxu0 0
        %1297 = vmatprep.subr.bf16.mxu0 0
        %1298 = vmatpush1.bf16.xpose.msra.mxu0 0
        %1299 = vmatprep.subr.bf16.mxu0 0
        %1300 = vmatpush1.bf16.xpose.msra.mxu0 0
        %1301 = vmatprep.subr.bf16.mxu0 0
        %1302 = vmatpush1.bf16.xpose.msra.mxu0 0
        %1303 = vmatprep.subr.bf16.mxu0 0
        %1304 = vmatpush1.bf16.xpose.msra.mxu0 0
        %1305 = vmatprep.subr.bf16.mxu0 0
        %1306 = vmatpush1.bf16.xpose.msra.mxu0 0
        %1307 = vmatprep.subr.bf16.mxu0 0
        %1308 = vmatpush1.bf16.xpose.msra.mxu0 0
        %1309 = vmatprep.subr.bf16.mxu0 0
        %1310 = vmatpush1.bf16.xpose.msra.mxu0 0
        %1311 = vmatprep.subr.bf16.mxu0 0
        %1312 = vmatpush1.bf16.xpose.msra.mxu0 0
        %1313 = vmatprep.subr.bf16.mxu0 0
        %1314 = vmatpush1.bf16.xpose.msra.mxu0 0
        %1315 = vmatprep.subr.bf16.mxu0 0
        %1316 = vmatpush1.bf16.xpose.msra.mxu0 0
        %1317 = vmatprep.subr.bf16.mxu0 0
        %1318 = vmatpush1.bf16.xpose.msra.mxu0 0
        %1319 = vmatprep.mubr.bf16.mxu0 0
        %1320 = vmatmul.mubr.bf16.gmra.mrb[0].mxu0 %v1282
        %v1321 = vpop.f32.mrb[0].mxu0
        %v1322 = vadd.f32 0.0, %v1321
        %v1323 = vpop.f32.mrb[0].mxu0
        %v1324 = vpop.f32.mrb[0].mxu0
        %v1325 = vpop.f32.mrb[0].mxu0
        %1326 = vdwg.mxu0
        %v1328 = vsel %vm1234, %v1199, 0
        %v1331 = vsel %vm1234, %v1211, 0
        %1333 = vmatprep.subr.bf16.mxu0 0
        %1334 = vmatpush1.bf16.xpose.msra.mxu0 %v1331
        %1335 = vmatprep.subr.bf16.mxu0 0
        %1336 = vmatpush1.bf16.xpose.msra.mxu0 0
        %1337 = vmatprep.subr.bf16.mxu0 0
        %1338 = vmatpush1.bf16.xpose.msra.mxu0 0
        %1339 = vmatprep.subr.bf16.mxu0 0
        %1340 = vmatpush1.bf16.xpose.msra.mxu0 0
        %1341 = vmatprep.subr.bf16.mxu0 0
        %1342 = vmatpush1.bf16.xpose.msra.mxu0 0
        %1343 = vmatprep.subr.bf16.mxu0 0
        %1344 = vmatpush1.bf16.xpose.msra.mxu0 0
        %1345 = vmatprep.subr.bf16.mxu0 0
        %1346 = vmatpush1.bf16.xpose.msra.mxu0 0
        %1347 = vmatprep.subr.bf16.mxu0 0
        %1348 = vmatpush1.bf16.xpose.msra.mxu0 0
        %1349 = vmatprep.subr.bf16.mxu0 0
        %1350 = vmatpush1.bf16.xpose.msra.mxu0 0
        %1351 = vmatprep.subr.bf16.mxu0 0
        %1352 = vmatpush1.bf16.xpose.msra.mxu0 0
        %1353 = vmatprep.subr.bf16.mxu0 0
        %1354 = vmatpush1.bf16.xpose.msra.mxu0 0
        %1355 = vmatprep.subr.bf16.mxu0 0
        %1356 = vmatpush1.bf16.xpose.msra.mxu0 0
        %1357 = vmatprep.subr.bf16.mxu0 0
        %1358 = vmatpush1.bf16.xpose.msra.mxu0 0
        %1359 = vmatprep.subr.bf16.mxu0 0
        %1360 = vmatpush1.bf16.xpose.msra.mxu0 0
        %1361 = vmatprep.subr.bf16.mxu0 0
        %1362 = vmatpush1.bf16.xpose.msra.mxu0 0
        %1363 = vmatprep.subr.bf16.mxu0 0
        %1364 = vmatpush1.bf16.xpose.msra.mxu0 0
        %1365 = vmatprep.mubr.bf16.mxu0 0
        %1366 = vmatmul.mubr.bf16.gmra.mrb[0].mxu0 %v1328
        %v1367 = vpop.f32.mrb[0].mxu0
        %v1368 = vadd.f32 0.0, %v1367
        %v1369 = vpop.f32.mrb[0].mxu0
        %v1370 = vpop.f32.mrb[0].mxu0
        %v1371 = vpop.f32.mrb[0].mxu0
        %1372 = vdwg.mxu0
        %v1374 = vsel %vm1234, %v1201, 0
        %v1377 = vsel %vm1234, %v1213, 0
        %1379 = vmatprep.subr.bf16.mxu0 0
        %1380 = vmatpush1.bf16.xpose.msra.mxu0 %v1377
        %1381 = vmatprep.subr.bf16.mxu0 0
        %1382 = vmatpush1.bf16.xpose.msra.mxu0 0
        %1383 = vmatprep.subr.bf16.mxu0 0
        %1384 = vmatpush1.bf16.xpose.msra.mxu0 0
        %1385 = vmatprep.subr.bf16.mxu0 0
        %1386 = vmatpush1.bf16.xpose.msra.mxu0 0
        %1387 = vmatprep.subr.bf16.mxu0 0
        %1388 = vmatpush1.bf16.xpose.msra.mxu0 0
        %1389 = vmatprep.subr.bf16.mxu0 0
        %1390 = vmatpush1.bf16.xpose.msra.mxu0 0
        %1391 = vmatprep.subr.bf16.mxu0 0
        %1392 = vmatpush1.bf16.xpose.msra.mxu0 0
        %1393 = vmatprep.subr.bf16.mxu0 0
        %1394 = vmatpush1.bf16.xpose.msra.mxu0 0
        %1395 = vmatprep.subr.bf16.mxu0 0
        %1396 = vmatpush1.bf16.xpose.msra.mxu0 0
        %1397 = vmatprep.subr.bf16.mxu0 0
        %1398 = vmatpush1.bf16.xpose.msra.mxu0 0
        %1399 = vmatprep.subr.bf16.mxu0 0
        %1400 = vmatpush1.bf16.xpose.msra.mxu0 0
        %1401 = vmatprep.subr.bf16.mxu0 0
        %1402 = vmatpush1.bf16.xpose.msra.mxu0 0
        %1403 = vmatprep.subr.bf16.mxu0 0
        %1404 = vmatpush1.bf16.xpose.msra.mxu0 0
        %1405 = vmatprep.subr.bf16.mxu0 0
        %1406 = vmatpush1.bf16.xpose.msra.mxu0 0
        %1407 = vmatprep.subr.bf16.mxu0 0
        %1408 = vmatpush1.bf16.xpose.msra.mxu0 0
        %1409 = vmatprep.subr.bf16.mxu0 0
        %1410 = vmatpush1.bf16.xpose.msra.mxu0 0
        %1411 = vmatprep.mubr.bf16.mxu0 0
        %1412 = vmatmul.mubr.bf16.gmra.mrb[0].mxu0 %v1374
        %v1413 = vpop.f32.mrb[0].mxu0
        %v1414 = vadd.f32 0.0, %v1413
        %v1415 = vpop.f32.mrb[0].mxu0
        %v1416 = vpop.f32.mrb[0].mxu0
        %v1417 = vpop.f32.mrb[0].mxu0
        %1418 = vdwg.mxu0
        %v1420 = vsel %vm1234, %v1203, 0
        %v1423 = vsel %vm1234, %v1215, 0
        %1425 = vmatprep.subr.bf16.mxu0 0
        %1426 = vmatpush1.bf16.xpose.msra.mxu0 %v1423
        %1427 = vmatprep.subr.bf16.mxu0 0
        %1428 = vmatpush1.bf16.xpose.msra.mxu0 0
        %1429 = vmatprep.subr.bf16.mxu0 0
        %1430 = vmatpush1.bf16.xpose.msra.mxu0 0
        %1431 = vmatprep.subr.bf16.mxu0 0
        %1432 = vmatpush1.bf16.xpose.msra.mxu0 0
        %1433 = vmatprep.subr.bf16.mxu0 0
        %1434 = vmatpush1.bf16.xpose.msra.mxu0 0
        %1435 = vmatprep.subr.bf16.mxu0 0
        %1436 = vmatpush1.bf16.xpose.msra.mxu0 0
        %1437 = vmatprep.subr.bf16.mxu0 0
        %1438 = vmatpush1.bf16.xpose.msra.mxu0 0
        %1439 = vmatprep.subr.bf16.mxu0 0
        %1440 = vmatpush1.bf16.xpose.msra.mxu0 0
        %1441 = vmatprep.subr.bf16.mxu0 0
        %1442 = vmatpush1.bf16.xpose.msra.mxu0 0
        %1443 = vmatprep.subr.bf16.mxu0 0
        %1444 = vmatpush1.bf16.xpose.msra.mxu0 0
        %1445 = vmatprep.subr.bf16.mxu0 0
        %1446 = vmatpush1.bf16.xpose.msra.mxu0 0
        %1447 = vmatprep.subr.bf16.mxu0 0
        %1448 = vmatpush1.bf16.xpose.msra.mxu0 0
        %1449 = vmatprep.subr.bf16.mxu0 0
        %1450 = vmatpush1.bf16.xpose.msra.mxu0 0
        %1451 = vmatprep.subr.bf16.mxu0 0
        %1452 = vmatpush1.bf16.xpose.msra.mxu0 0
        %1453 = vmatprep.subr.bf16.mxu0 0
        %1454 = vmatpush1.bf16.xpose.msra.mxu0 0
        %1455 = vmatprep.subr.bf16.mxu0 0
        %1456 = vmatpush1.bf16.xpose.msra.mxu0 0
        %1457 = vmatprep.mubr.bf16.mxu0 0
        %1458 = vmatmul.mubr.bf16.gmra.mrb[0].mxu0 %v1420
        %v1459 = vpop.f32.mrb[0].mxu0
        %v1460 = vadd.f32 0.0, %v1459
        %v1461 = vpop.f32.mrb[0].mxu0
        %v1462 = vpop.f32.mrb[0].mxu0
        %v1463 = vpop.f32.mrb[0].mxu0
        %1464 = vdwg.mxu0
        %v1466 = vsel %vm1234, %v1205, 0
        %v1469 = vsel %vm1234, %v1217, 0
        %1471 = vmatprep.subr.bf16.mxu0 0
        %1472 = vmatpush1.bf16.xpose.msra.mxu0 %v1469
        %1473 = vmatprep.subr.bf16.mxu0 0
        %1474 = vmatpush1.bf16.xpose.msra.mxu0 0
        %1475 = vmatprep.subr.bf16.mxu0 0
        %1476 = vmatpush1.bf16.xpose.msra.mxu0 0
        %1477 = vmatprep.subr.bf16.mxu0 0
        %1478 = vmatpush1.bf16.xpose.msra.mxu0 0
        %1479 = vmatprep.subr.bf16.mxu0 0
        %1480 = vmatpush1.bf16.xpose.msra.mxu0 0
        %1481 = vmatprep.subr.bf16.mxu0 0
        %1482 = vmatpush1.bf16.xpose.msra.mxu0 0
        %1483 = vmatprep.subr.bf16.mxu0 0
        %1484 = vmatpush1.bf16.xpose.msra.mxu0 0
        %1485 = vmatprep.subr.bf16.mxu0 0
        %1486 = vmatpush1.bf16.xpose.msra.mxu0 0
        %1487 = vmatprep.subr.bf16.mxu0 0
        %1488 = vmatpush1.bf16.xpose.msra.mxu0 0
        %1489 = vmatprep.subr.bf16.mxu0 0
        %1490 = vmatpush1.bf16.xpose.msra.mxu0 0
        %1491 = vmatprep.subr.bf16.mxu0 0
        %1492 = vmatpush1.bf16.xpose.msra.mxu0 0
        %1493 = vmatprep.subr.bf16.mxu0 0
        %1494 = vmatpush1.bf16.xpose.msra.mxu0 0
        %1495 = vmatprep.subr.bf16.mxu0 0
        %1496 = vmatpush1.bf16.xpose.msra.mxu0 0
        %1497 = vmatprep.subr.bf16.mxu0 0
        %1498 = vmatpush1.bf16.xpose.msra.mxu0 0
        %1499 = vmatprep.subr.bf16.mxu0 0
        %1500 = vmatpush1.bf16.xpose.msra.mxu0 0
        %1501 = vmatprep.subr.bf16.mxu0 0
        %1502 = vmatpush1.bf16.xpose.msra.mxu0 0
        %1503 = vmatprep.mubr.bf16.mxu0 0
        %1504 = vmatmul.mubr.bf16.gmra.mrb[0].mxu0 %v1466
        %v1505 = vpop.f32.mrb[0].mxu0
        %v1506 = vadd.f32 0.0, %v1505
        %v1507 = vpop.f32.mrb[0].mxu0
        %v1508 = vpop.f32.mrb[0].mxu0
        %v1509 = vpop.f32.mrb[0].mxu0
        %1510 = vdwg.mxu0
        %v1512 = vsel %vm1234, %v1207, 0
        %v1515 = vsel %vm1234, %v1219, 0
        %1517 = vmatprep.subr.bf16.mxu0 0
        %1518 = vmatpush1.bf16.xpose.msra.mxu0 %v1515
        %1519 = vmatprep.subr.bf16.mxu0 0
        %1520 = vmatpush1.bf16.xpose.msra.mxu0 0
        %1521 = vmatprep.subr.bf16.mxu0 0
        %1522 = vmatpush1.bf16.xpose.msra.mxu0 0
        %1523 = vmatprep.subr.bf16.mxu0 0
        %1524 = vmatpush1.bf16.xpose.msra.mxu0 0
        %1525 = vmatprep.subr.bf16.mxu0 0
        %1526 = vmatpush1.bf16.xpose.msra.mxu0 0
        %1527 = vmatprep.subr.bf16.mxu0 0
        %1528 = vmatpush1.bf16.xpose.msra.mxu0 0
        %1529 = vmatprep.subr.bf16.mxu0 0
        %1530 = vmatpush1.bf16.xpose.msra.mxu0 0
        %1531 = vmatprep.subr.bf16.mxu0 0
        %1532 = vmatpush1.bf16.xpose.msra.mxu0 0
        %1533 = vmatprep.subr.bf16.mxu0 0
        %1534 = vmatpush1.bf16.xpose.msra.mxu0 0
        %1535 = vmatprep.subr.bf16.mxu0 0
        %1536 = vmatpush1.bf16.xpose.msra.mxu0 0
        %1537 = vmatprep.subr.bf16.mxu0 0
        %1538 = vmatpush1.bf16.xpose.msra.mxu0 0
        %1539 = vmatprep.subr.bf16.mxu0 0
        %1540 = vmatpush1.bf16.xpose.msra.mxu0 0
        %1541 = vmatprep.subr.bf16.mxu0 0
        %1542 = vmatpush1.bf16.xpose.msra.mxu0 0
        %1543 = vmatprep.subr.bf16.mxu0 0
        %1544 = vmatpush1.bf16.xpose.msra.mxu0 0
        %1545 = vmatprep.subr.bf16.mxu0 0
        %1546 = vmatpush1.bf16.xpose.msra.mxu0 0
        %1547 = vmatprep.subr.bf16.mxu0 0
        %1548 = vmatpush1.bf16.xpose.msra.mxu0 0
        %1549 = vmatprep.mubr.bf16.mxu0 0
        %1550 = vmatmul.mubr.bf16.gmra.mrb[0].mxu0 %v1512
        %v1551 = vpop.f32.mrb[0].mxu0
        %v1552 = vadd.f32 0.0, %v1551
        %v1553 = vpop.f32.mrb[0].mxu0
        %v1554 = vpop.f32.mrb[0].mxu0
        %v1555 = vpop.f32.mrb[0].mxu0
        %1556 = vdwg.mxu0
        %v1558 = vsel %vm1234, %v1209, 0
        %v1561 = vsel %vm1234, %v1221, 0
        %1563 = vmatprep.subr.bf16.mxu0 0
        %1564 = vmatpush1.bf16.xpose.msra.mxu0 %v1561
        %1565 = vmatprep.subr.bf16.mxu0 0
        %1566 = vmatpush1.bf16.xpose.msra.mxu0 0
        %1567 = vmatprep.subr.bf16.mxu0 0
        %1568 = vmatpush1.bf16.xpose.msra.mxu0 0
        %1569 = vmatprep.subr.bf16.mxu0 0
        %1570 = vmatpush1.bf16.xpose.msra.mxu0 0
        %1571 = vmatprep.subr.bf16.mxu0 0
        %1572 = vmatpush1.bf16.xpose.msra.mxu0 0
        %1573 = vmatprep.subr.bf16.mxu0 0
        %1574 = vmatpush1.bf16.xpose.msra.mxu0 0
        %1575 = vmatprep.subr.bf16.mxu0 0
        %1576 = vmatpush1.bf16.xpose.msra.mxu0 0
        %1577 = vmatprep.subr.bf16.mxu0 0
        %1578 = vmatpush1.bf16.xpose.msra.mxu0 0
        %1579 = vmatprep.subr.bf16.mxu0 0
        %1580 = vmatpush1.bf16.xpose.msra.mxu0 0
        %1581 = vmatprep.subr.bf16.mxu0 0
        %1582 = vmatpush1.bf16.xpose.msra.mxu0 0
        %1583 = vmatprep.subr.bf16.mxu0 0
        %1584 = vmatpush1.bf16.xpose.msra.mxu0 0
        %1585 = vmatprep.subr.bf16.mxu0 0
        %1586 = vmatpush1.bf16.xpose.msra.mxu0 0
        %1587 = vmatprep.subr.bf16.mxu0 0
        %1588 = vmatpush1.bf16.xpose.msra.mxu0 0
        %1589 = vmatprep.subr.bf16.mxu0 0
        %1590 = vmatpush1.bf16.xpose.msra.mxu0 0
        %1591 = vmatprep.subr.bf16.mxu0 0
        %1592 = vmatpush1.bf16.xpose.msra.mxu0 0
        %1593 = vmatprep.subr.bf16.mxu0 0
        %1594 = vmatpush1.bf16.xpose.msra.mxu0 0
        %1595 = vmatprep.mubr.bf16.mxu0 0
        %1596 = vmatmul.mubr.bf16.gmra.mrb[0].mxu0 %v1558
        %v1597 = vpop.f32.mrb[0].mxu0
        %v1598 = vadd.f32 0.0, %v1597
        %v1599 = vpop.f32.mrb[0].mxu0
        %v1600 = vpop.f32.mrb[0].mxu0
        %v1601 = vpop.f32.mrb[0].mxu0
        %1602 = vdwg.mxu0
        %v1603 = vmul.f32 %v1276, 0.35355338
        %v1604 = vmul.f32 %v1322, 0.35355338
        %v1605 = vmul.f32 %v1368, 0.35355338
        %v1606 = vmul.f32 %v1414, 0.35355338
        %v1607 = vmul.f32 %v1460, 0.35355338
        %v1608 = vmul.f32 %v1506, 0.35355338
        %v1609 = vmul.f32 %v1552, 0.35355338
        %v1610 = vmul.f32 %v1598, 0.35355338
        %v1613 = vlaneseq
        %v1614 = vshrl.u32 %v1613, 7
        %v1615 = vsub.s32 0, %v1614
        %v1616 = vrot.slane %v956, %v1615
        %v1617 = vlaneseq
        %v1618 = vshrl.u32 %v1617, 7
        %v1619 = vsub.s32 0, %v1618
        %v1620 = vrot.slane %v957, %v1619
        %v1623 = vadd.f32 %v1603, %v1616
        %v1624 = vadd.f32 %v1604, %v1620
        %v1625 = vadd.f32 %v1605, %v1616
        %v1626 = vadd.f32 %v1606, %v1620
        %v1627 = vadd.f32 %v1607, %v1616
        %v1628 = vadd.f32 %v1608, %v1620
        %v1629 = vadd.f32 %v1609, %v1616
        %v1630 = vadd.f32 %v1610, %v1620
        %v1631 = vsel %vm1234, %v1623, -inf
        %1632 = vmax.xlane.f32.xlu0 %v1631
        %v1633 = vpop.xlane.xlu0 %1632
        %v1634 = vsel %vm1234, %v1624, -inf
        %1635 = vmax.xlane.f32.xlu0 %v1634
        %v1636 = vpop.xlane.xlu0 %1635
        %v1637 = vsel %vm1234, %v1625, -inf
        %1638 = vmax.xlane.f32.xlu0 %v1637
        %v1639 = vpop.xlane.xlu0 %1638
        %v1640 = vsel %vm1234, %v1626, -inf
        %1641 = vmax.xlane.f32.xlu0 %v1640
        %v1642 = vpop.xlane.xlu0 %1641
        %v1643 = vsel %vm1234, %v1627, -inf
        %1644 = vmax.xlane.f32.xlu0 %v1643
        %v1645 = vpop.xlane.xlu0 %1644
        %v1646 = vsel %vm1234, %v1628, -inf
        %1647 = vmax.xlane.f32.xlu0 %v1646
        %v1648 = vpop.xlane.xlu0 %1647
        %v1649 = vsel %vm1234, %v1629, -inf
        %1650 = vmax.xlane.f32.xlu0 %v1649
        %v1651 = vpop.xlane.xlu0 %1650
        %v1652 = vsel %vm1234, %v1630, -inf
        %1653 = vmax.xlane.f32.xlu0 %v1652
        %v1654 = vpop.xlane.xlu0 %1653
        %v1655 = vsub.f32 %v1623, %v1633
        %v1656 = vsub.f32 %v1624, %v1636
        %v1657 = vsub.f32 %v1625, %v1639
        %v1658 = vsub.f32 %v1626, %v1642
        %v1659 = vsub.f32 %v1627, %v1645
        %v1660 = vsub.f32 %v1628, %v1648
        %v1661 = vsub.f32 %v1629, %v1651
        %v1662 = vsub.f32 %v1630, %v1654
        %v1663 = vmul.f32 %v1655, 1.442695
        %v1664 = vpow.pop %v1663
        %v1665 = vmul.f32 %v1656, 1.442695
        %v1666 = vpow.pop %v1665
        %v1667 = vmul.f32 %v1657, 1.442695
        %v1668 = vpow.pop %v1667
        %v1669 = vmul.f32 %v1658, 1.442695
        %v1670 = vpow.pop %v1669
        %v1671 = vmul.f32 %v1659, 1.442695
        %v1672 = vpow.pop %v1671
        %v1673 = vmul.f32 %v1660, 1.442695
        %v1674 = vpow.pop %v1673
        %v1675 = vmul.f32 %v1661, 1.442695
        %v1676 = vpow.pop %v1675
        %v1677 = vmul.f32 %v1662, 1.442695
        %v1678 = vpow.pop %v1677
        %v1679 = vsel %vm1234, %v1664, 0.0
        %1680 = vadd.xlane.f32.xlu0 %v1679
        %v1681 = vpop.xlane.xlu0 %1680
        %v1682 = vsel %vm1234, %v1666, 0.0
        %1683 = vadd.xlane.f32.xlu0 %v1682
        %v1684 = vpop.xlane.xlu0 %1683
        %v1685 = vsel %vm1234, %v1668, 0.0
        %1686 = vadd.xlane.f32.xlu0 %v1685
        %v1687 = vpop.xlane.xlu0 %1686
        %v1688 = vsel %vm1234, %v1670, 0.0
        %1689 = vadd.xlane.f32.xlu0 %v1688
        %v1690 = vpop.xlane.xlu0 %1689
        %v1691 = vsel %vm1234, %v1672, 0.0
        %1692 = vadd.xlane.f32.xlu0 %v1691
        %v1693 = vpop.xlane.xlu0 %1692
        %v1694 = vsel %vm1234, %v1674, 0.0
        %1695 = vadd.xlane.f32.xlu0 %v1694
        %v1696 = vpop.xlane.xlu0 %1695
        %v1697 = vsel %vm1234, %v1676, 0.0
        %1698 = vadd.xlane.f32.xlu0 %v1697
        %v1699 = vpop.xlane.xlu0 %1698
        %v1700 = vsel %vm1234, %v1678, 0.0
        %1701 = vadd.xlane.f32.xlu0 %v1700
        %v1702 = vpop.xlane.xlu0 %1701
        %v1703 = vrcp.pop %v1681
        %v1704 = vrcp.pop %v1684
        %v1705 = vrcp.pop %v1687
        %v1706 = vrcp.pop %v1690
        %v1707 = vrcp.pop %v1693
        %v1708 = vrcp.pop %v1696
        %v1709 = vrcp.pop %v1699
        %v1710 = vrcp.pop %v1702
        %v1711 = vmul.f32 %v1664, %v1703
        %v1712 = vmul.f32 %v1666, %v1704
        %v1713 = vmul.f32 %v1668, %v1705
        %v1714 = vmul.f32 %v1670, %v1706
        %v1715 = vmul.f32 %v1672, %v1707
        %v1716 = vmul.f32 %v1674, %v1708
        %v1717 = vmul.f32 %v1676, %v1709
        %v1718 = vmul.f32 %v1678, %v1710
        %v1719 = vpack.c.bf16 %v1711, %v1711
        %v1720 = vpack.c.bf16 %v1712, %v1712
        %v1721 = vpack.c.bf16 %v1713, %v1713
        %v1722 = vpack.c.bf16 %v1714, %v1714
        %v1723 = vpack.c.bf16 %v1715, %v1715
        %v1724 = vpack.c.bf16 %v1716, %v1716
        %v1725 = vpack.c.bf16 %v1717, %v1717
        %v1726 = vpack.c.bf16 %v1718, %v1718
        %v1728 = vsel %vm1234, %v1719, 0
        %vm1730 = vcmask 1043456
        %v1732 = vsel %vm1730, %v1196, 0
        %1734 = vmatprep.subr.bf16.mxu0 0
        %1735 = vmatpush1.bf16.msra.mxu0 %v1732
        %1736 = vmatprep.subr.bf16.mxu0 0
        %1737 = vmatpush1.bf16.msra.mxu0 0
        %1738 = vmatprep.subr.bf16.mxu0 0
        %1739 = vmatpush1.bf16.msra.mxu0 0
        %1740 = vmatprep.subr.bf16.mxu0 0
        %1741 = vmatpush1.bf16.msra.mxu0 0
        %1742 = vmatprep.subr.bf16.mxu0 0
        %1743 = vmatpush1.bf16.msra.mxu0 0
        %1744 = vmatprep.subr.bf16.mxu0 0
        %1745 = vmatpush1.bf16.msra.mxu0 0
        %1746 = vmatprep.subr.bf16.mxu0 0
        %1747 = vmatpush1.bf16.msra.mxu0 0
        %1748 = vmatprep.subr.bf16.mxu0 0
        %1749 = vmatpush1.bf16.msra.mxu0 0
        %1750 = vmatprep.subr.bf16.mxu0 0
        %1751 = vmatpush1.bf16.msra.mxu0 0
        %1752 = vmatprep.subr.bf16.mxu0 0
        %1753 = vmatpush1.bf16.msra.mxu0 0
        %1754 = vmatprep.subr.bf16.mxu0 0
        %1755 = vmatpush1.bf16.msra.mxu0 0
        %1756 = vmatprep.subr.bf16.mxu0 0
        %1757 = vmatpush1.bf16.msra.mxu0 0
        %1758 = vmatprep.subr.bf16.mxu0 0
        %1759 = vmatpush1.bf16.msra.mxu0 0
        %1760 = vmatprep.subr.bf16.mxu0 0
        %1761 = vmatpush1.bf16.msra.mxu0 0
        %1762 = vmatprep.subr.bf16.mxu0 0
        %1763 = vmatpush1.bf16.msra.mxu0 0
        %1764 = vmatprep.subr.bf16.mxu0 0
        %1765 = vmatpush1.bf16.msra.mxu0 0
        %1766 = vmatprep.mubr.bf16.mxu0 0
        %1767 = vmatmul.mubr.bf16.gmra.mrb[0].mxu0 %v1728
        %v1768 = vpop.f32.mrb[0].mxu0
        %v1769 = vadd.f32 0.0, %v1768
        %v1770 = vpop.f32.mrb[0].mxu0
        %v1771 = vpop.f32.mrb[0].mxu0
        %v1772 = vpop.f32.mrb[0].mxu0
        %1773 = vdwg.mxu0
        %v1775 = vsel %vm1234, %v1720, 0
        %v1778 = vsel %vm1730, %v1197, 0
        %1780 = vmatprep.subr.bf16.mxu0 0
        %1781 = vmatpush1.bf16.msra.mxu0 %v1778
        %1782 = vmatprep.subr.bf16.mxu0 0
        %1783 = vmatpush1.bf16.msra.mxu0 0
        %1784 = vmatprep.subr.bf16.mxu0 0
        %1785 = vmatpush1.bf16.msra.mxu0 0
        %1786 = vmatprep.subr.bf16.mxu0 0
        %1787 = vmatpush1.bf16.msra.mxu0 0
        %1788 = vmatprep.subr.bf16.mxu0 0
        %1789 = vmatpush1.bf16.msra.mxu0 0
        %1790 = vmatprep.subr.bf16.mxu0 0
        %1791 = vmatpush1.bf16.msra.mxu0 0
        %1792 = vmatprep.subr.bf16.mxu0 0
        %1793 = vmatpush1.bf16.msra.mxu0 0
        %1794 = vmatprep.subr.bf16.mxu0 0
        %1795 = vmatpush1.bf16.msra.mxu0 0
        %1796 = vmatprep.subr.bf16.mxu0 0
        %1797 = vmatpush1.bf16.msra.mxu0 0
        %1798 = vmatprep.subr.bf16.mxu0 0
        %1799 = vmatpush1.bf16.msra.mxu0 0
        %1800 = vmatprep.subr.bf16.mxu0 0
        %1801 = vmatpush1.bf16.msra.mxu0 0
        %1802 = vmatprep.subr.bf16.mxu0 0
        %1803 = vmatpush1.bf16.msra.mxu0 0
        %1804 = vmatprep.subr.bf16.mxu0 0
        %1805 = vmatpush1.bf16.msra.mxu0 0
        %1806 = vmatprep.subr.bf16.mxu0 0
        %1807 = vmatpush1.bf16.msra.mxu0 0
        %1808 = vmatprep.subr.bf16.mxu0 0
        %1809 = vmatpush1.bf16.msra.mxu0 0
        %1810 = vmatprep.subr.bf16.mxu0 0
        %1811 = vmatpush1.bf16.msra.mxu0 0
        %1812 = vmatprep.mubr.bf16.mxu0 0
        %1813 = vmatmul.mubr.bf16.gmra.mrb[0].mxu0 %v1775
        %v1814 = vpop.f32.mrb[0].mxu0
        %v1815 = vadd.f32 0.0, %v1814
        %v1816 = vpop.f32.mrb[0].mxu0
        %v1817 = vpop.f32.mrb[0].mxu0
        %v1818 = vpop.f32.mrb[0].mxu0
        %1819 = vdwg.mxu0
        %v1821 = vsel %vm1234, %v1721, 0
        %v1824 = vsel %vm1730, %v1223, 0
        %1826 = vmatprep.subr.bf16.mxu0 0
        %1827 = vmatpush1.bf16.msra.mxu0 %v1824
        %1828 = vmatprep.subr.bf16.mxu0 0
        %1829 = vmatpush1.bf16.msra.mxu0 0
        %1830 = vmatprep.subr.bf16.mxu0 0
        %1831 = vmatpush1.bf16.msra.mxu0 0
        %1832 = vmatprep.subr.bf16.mxu0 0
        %1833 = vmatpush1.bf16.msra.mxu0 0
        %1834 = vmatprep.subr.bf16.mxu0 0
        %1835 = vmatpush1.bf16.msra.mxu0 0
        %1836 = vmatprep.subr.bf16.mxu0 0
        %1837 = vmatpush1.bf16.msra.mxu0 0
        %1838 = vmatprep.subr.bf16.mxu0 0
        %1839 = vmatpush1.bf16.msra.mxu0 0
        %1840 = vmatprep.subr.bf16.mxu0 0
        %1841 = vmatpush1.bf16.msra.mxu0 0
        %1842 = vmatprep.subr.bf16.mxu0 0
        %1843 = vmatpush1.bf16.msra.mxu0 0
        %1844 = vmatprep.subr.bf16.mxu0 0
        %1845 = vmatpush1.bf16.msra.mxu0 0
        %1846 = vmatprep.subr.bf16.mxu0 0
        %1847 = vmatpush1.bf16.msra.mxu0 0
        %1848 = vmatprep.subr.bf16.mxu0 0
        %1849 = vmatpush1.bf16.msra.mxu0 0
        %1850 = vmatprep.subr.bf16.mxu0 0
        %1851 = vmatpush1.bf16.msra.mxu0 0
        %1852 = vmatprep.subr.bf16.mxu0 0
        %1853 = vmatpush1.bf16.msra.mxu0 0
        %1854 = vmatprep.subr.bf16.mxu0 0
        %1855 = vmatpush1.bf16.msra.mxu0 0
        %1856 = vmatprep.subr.bf16.mxu0 0
        %1857 = vmatpush1.bf16.msra.mxu0 0
        %1858 = vmatprep.mubr.bf16.mxu0 0
        %1859 = vmatmul.mubr.bf16.gmra.mrb[0].mxu0 %v1821
        %v1860 = vpop.f32.mrb[0].mxu0
        %v1861 = vadd.f32 0.0, %v1860
        %v1862 = vpop.f32.mrb[0].mxu0
        %v1863 = vpop.f32.mrb[0].mxu0
        %v1864 = vpop.f32.mrb[0].mxu0
        %1865 = vdwg.mxu0
        %v1867 = vsel %vm1234, %v1722, 0
        %v1870 = vsel %vm1730, %v1225, 0
        %1872 = vmatprep.subr.bf16.mxu0 0
        %1873 = vmatpush1.bf16.msra.mxu0 %v1870
        %1874 = vmatprep.subr.bf16.mxu0 0
        %1875 = vmatpush1.bf16.msra.mxu0 0
        %1876 = vmatprep.subr.bf16.mxu0 0
        %1877 = vmatpush1.bf16.msra.mxu0 0
        %1878 = vmatprep.subr.bf16.mxu0 0
        %1879 = vmatpush1.bf16.msra.mxu0 0
        %1880 = vmatprep.subr.bf16.mxu0 0
        %1881 = vmatpush1.bf16.msra.mxu0 0
        %1882 = vmatprep.subr.bf16.mxu0 0
        %1883 = vmatpush1.bf16.msra.mxu0 0
        %1884 = vmatprep.subr.bf16.mxu0 0
        %1885 = vmatpush1.bf16.msra.mxu0 0
        %1886 = vmatprep.subr.bf16.mxu0 0
        %1887 = vmatpush1.bf16.msra.mxu0 0
        %1888 = vmatprep.subr.bf16.mxu0 0
        %1889 = vmatpush1.bf16.msra.mxu0 0
        %1890 = vmatprep.subr.bf16.mxu0 0
        %1891 = vmatpush1.bf16.msra.mxu0 0
        %1892 = vmatprep.subr.bf16.mxu0 0
        %1893 = vmatpush1.bf16.msra.mxu0 0
        %1894 = vmatprep.subr.bf16.mxu0 0
        %1895 = vmatpush1.bf16.msra.mxu0 0
        %1896 = vmatprep.subr.bf16.mxu0 0
        %1897 = vmatpush1.bf16.msra.mxu0 0
        %1898 = vmatprep.subr.bf16.mxu0 0
        %1899 = vmatpush1.bf16.msra.mxu0 0
        %1900 = vmatprep.subr.bf16.mxu0 0
        %1901 = vmatpush1.bf16.msra.mxu0 0
        %1902 = vmatprep.subr.bf16.mxu0 0
        %1903 = vmatpush1.bf16.msra.mxu0 0
        %1904 = vmatprep.mubr.bf16.mxu0 0
        %1905 = vmatmul.mubr.bf16.gmra.mrb[0].mxu0 %v1867
        %v1906 = vpop.f32.mrb[0].mxu0
        %v1907 = vadd.f32 0.0, %v1906
        %v1908 = vpop.f32.mrb[0].mxu0
        %v1909 = vpop.f32.mrb[0].mxu0
        %v1910 = vpop.f32.mrb[0].mxu0
        %1911 = vdwg.mxu0
        %v1913 = vsel %vm1234, %v1723, 0
        %v1916 = vsel %vm1730, %v1227, 0
        %1918 = vmatprep.subr.bf16.mxu0 0
        %1919 = vmatpush1.bf16.msra.mxu0 %v1916
        %1920 = vmatprep.subr.bf16.mxu0 0
        %1921 = vmatpush1.bf16.msra.mxu0 0
        %1922 = vmatprep.subr.bf16.mxu0 0
        %1923 = vmatpush1.bf16.msra.mxu0 0
        %1924 = vmatprep.subr.bf16.mxu0 0
        %1925 = vmatpush1.bf16.msra.mxu0 0
        %1926 = vmatprep.subr.bf16.mxu0 0
        %1927 = vmatpush1.bf16.msra.mxu0 0
        %1928 = vmatprep.subr.bf16.mxu0 0
        %1929 = vmatpush1.bf16.msra.mxu0 0
        %1930 = vmatprep.subr.bf16.mxu0 0
        %1931 = vmatpush1.bf16.msra.mxu0 0
        %1932 = vmatprep.subr.bf16.mxu0 0
        %1933 = vmatpush1.bf16.msra.mxu0 0
        %1934 = vmatprep.subr.bf16.mxu0 0
        %1935 = vmatpush1.bf16.msra.mxu0 0
        %1936 = vmatprep.subr.bf16.mxu0 0
        %1937 = vmatpush1.bf16.msra.mxu0 0
        %1938 = vmatprep.subr.bf16.mxu0 0
        %1939 = vmatpush1.bf16.msra.mxu0 0
        %1940 = vmatprep.subr.bf16.mxu0 0
        %1941 = vmatpush1.bf16.msra.mxu0 0
        %1942 = vmatprep.subr.bf16.mxu0 0
        %1943 = vmatpush1.bf16.msra.mxu0 0
        %1944 = vmatprep.subr.bf16.mxu0 0
        %1945 = vmatpush1.bf16.msra.mxu0 0
        %1946 = vmatprep.subr.bf16.mxu0 0
        %1947 = vmatpush1.bf16.msra.mxu0 0
        %1948 = vmatprep.subr.bf16.mxu0 0
        %1949 = vmatpush1.bf16.msra.mxu0 0
        %1950 = vmatprep.mubr.bf16.mxu0 0
        %1951 = vmatmul.mubr.bf16.gmra.mrb[0].mxu0 %v1913
        %v1952 = vpop.f32.mrb[0].mxu0
        %v1953 = vadd.f32 0.0, %v1952
        %v1954 = vpop.f32.mrb[0].mxu0
        %v1955 = vpop.f32.mrb[0].mxu0
        %v1956 = vpop.f32.mrb[0].mxu0
        %1957 = vdwg.mxu0
        %v1959 = vsel %vm1234, %v1724, 0
        %v1962 = vsel %vm1730, %v1229, 0
        %1964 = vmatprep.subr.bf16.mxu0 0
        %1965 = vmatpush1.bf16.msra.mxu0 %v1962
        %1966 = vmatprep.subr.bf16.mxu0 0
        %1967 = vmatpush1.bf16.msra.mxu0 0
        %1968 = vmatprep.subr.bf16.mxu0 0
        %1969 = vmatpush1.bf16.msra.mxu0 0
        %1970 = vmatprep.subr.bf16.mxu0 0
        %1971 = vmatpush1.bf16.msra.mxu0 0
        %1972 = vmatprep.subr.bf16.mxu0 0
        %1973 = vmatpush1.bf16.msra.mxu0 0
        %1974 = vmatprep.subr.bf16.mxu0 0
        %1975 = vmatpush1.bf16.msra.mxu0 0
        %1976 = vmatprep.subr.bf16.mxu0 0
        %1977 = vmatpush1.bf16.msra.mxu0 0
        %1978 = vmatprep.subr.bf16.mxu0 0
        %1979 = vmatpush1.bf16.msra.mxu0 0
        %1980 = vmatprep.subr.bf16.mxu0 0
        %1981 = vmatpush1.bf16.msra.mxu0 0
        %1982 = vmatprep.subr.bf16.mxu0 0
        %1983 = vmatpush1.bf16.msra.mxu0 0
        %1984 = vmatprep.subr.bf16.mxu0 0
        %1985 = vmatpush1.bf16.msra.mxu0 0
        %1986 = vmatprep.subr.bf16.mxu0 0
        %1987 = vmatpush1.bf16.msra.mxu0 0
        %1988 = vmatprep.subr.bf16.mxu0 0
        %1989 = vmatpush1.bf16.msra.mxu0 0
        %1990 = vmatprep.subr.bf16.mxu0 0
        %1991 = vmatpush1.bf16.msra.mxu0 0
        %1992 = vmatprep.subr.bf16.mxu0 0
        %1993 = vmatpush1.bf16.msra.mxu0 0
        %1994 = vmatprep.subr.bf16.mxu0 0
        %1995 = vmatpush1.bf16.msra.mxu0 0
        %1996 = vmatprep.mubr.bf16.mxu0 0
        %1997 = vmatmul.mubr.bf16.gmra.mrb[0].mxu0 %v1959
        %v1998 = vpop.f32.mrb[0].mxu0
        %v1999 = vadd.f32 0.0, %v1998
        %v2000 = vpop.f32.mrb[0].mxu0
        %v2001 = vpop.f32.mrb[0].mxu0
        %v2002 = vpop.f32.mrb[0].mxu0
        %2003 = vdwg.mxu0
        %v2005 = vsel %vm1234, %v1725, 0
        %v2008 = vsel %vm1730, %v1231, 0
        %2010 = vmatprep.subr.bf16.mxu0 0
        %2011 = vmatpush1.bf16.msra.mxu0 %v2008
        %2012 = vmatprep.subr.bf16.mxu0 0
        %2013 = vmatpush1.bf16.msra.mxu0 0
        %2014 = vmatprep.subr.bf16.mxu0 0
        %2015 = vmatpush1.bf16.msra.mxu0 0
        %2016 = vmatprep.subr.bf16.mxu0 0
        %2017 = vmatpush1.bf16.msra.mxu0 0
        %2018 = vmatprep.subr.bf16.mxu0 0
        %2019 = vmatpush1.bf16.msra.mxu0 0
        %2020 = vmatprep.subr.bf16.mxu0 0
        %2021 = vmatpush1.bf16.msra.mxu0 0
        %2022 = vmatprep.subr.bf16.mxu0 0
        %2023 = vmatpush1.bf16.msra.mxu0 0
        %2024 = vmatprep.subr.bf16.mxu0 0
        %2025 = vmatpush1.bf16.msra.mxu0 0
        %2026 = vmatprep.subr.bf16.mxu0 0
        %2027 = vmatpush1.bf16.msra.mxu0 0
        %2028 = vmatprep.subr.bf16.mxu0 0
        %2029 = vmatpush1.bf16.msra.mxu0 0
        %2030 = vmatprep.subr.bf16.mxu0 0
        %2031 = vmatpush1.bf16.msra.mxu0 0
        %2032 = vmatprep.subr.bf16.mxu0 0
        %2033 = vmatpush1.bf16.msra.mxu0 0
        %2034 = vmatprep.subr.bf16.mxu0 0
        %2035 = vmatpush1.bf16.msra.mxu0 0
        %2036 = vmatprep.subr.bf16.mxu0 0
        %2037 = vmatpush1.bf16.msra.mxu0 0
        %2038 = vmatprep.subr.bf16.mxu0 0
        %2039 = vmatpush1.bf16.msra.mxu0 0
        %2040 = vmatprep.subr.bf16.mxu0 0
        %2041 = vmatpush1.bf16.msra.mxu0 0
        %2042 = vmatprep.mubr.bf16.mxu0 0
        %2043 = vmatmul.mubr.bf16.gmra.mrb[0].mxu0 %v2005
        %v2044 = vpop.f32.mrb[0].mxu0
        %v2045 = vadd.f32 0.0, %v2044
        %v2046 = vpop.f32.mrb[0].mxu0
        %v2047 = vpop.f32.mrb[0].mxu0
        %v2048 = vpop.f32.mrb[0].mxu0
        %2049 = vdwg.mxu0
        %v2051 = vsel %vm1234, %v1726, 0
        %v2054 = vsel %vm1730, %v1233, 0
        %2056 = vmatprep.subr.bf16.mxu0 0
        %2057 = vmatpush1.bf16.msra.mxu0 %v2054
        %2058 = vmatprep.subr.bf16.mxu0 0
        %2059 = vmatpush1.bf16.msra.mxu0 0
        %2060 = vmatprep.subr.bf16.mxu0 0
        %2061 = vmatpush1.bf16.msra.mxu0 0
        %2062 = vmatprep.subr.bf16.mxu0 0
        %2063 = vmatpush1.bf16.msra.mxu0 0
        %2064 = vmatprep.subr.bf16.mxu0 0
        %2065 = vmatpush1.bf16.msra.mxu0 0
        %2066 = vmatprep.subr.bf16.mxu0 0
        %2067 = vmatpush1.bf16.msra.mxu0 0
        %2068 = vmatprep.subr.bf16.mxu0 0
        %2069 = vmatpush1.bf16.msra.mxu0 0
        %2070 = vmatprep.subr.bf16.mxu0 0
        %2071 = vmatpush1.bf16.msra.mxu0 0
        %2072 = vmatprep.subr.bf16.mxu0 0
        %2073 = vmatpush1.bf16.msra.mxu0 0
        %2074 = vmatprep.subr.bf16.mxu0 0
        %2075 = vmatpush1.bf16.msra.mxu0 0
        %2076 = vmatprep.subr.bf16.mxu0 0
        %2077 = vmatpush1.bf16.msra.mxu0 0
        %2078 = vmatprep.subr.bf16.mxu0 0
        %2079 = vmatpush1.bf16.msra.mxu0 0
        %2080 = vmatprep.subr.bf16.mxu0 0
        %2081 = vmatpush1.bf16.msra.mxu0 0
        %2082 = vmatprep.subr.bf16.mxu0 0
        %2083 = vmatpush1.bf16.msra.mxu0 0
        %2084 = vmatprep.subr.bf16.mxu0 0
        %2085 = vmatpush1.bf16.msra.mxu0 0
        %2086 = vmatprep.subr.bf16.mxu0 0
        %2087 = vmatpush1.bf16.msra.mxu0 0
        %2088 = vmatprep.mubr.bf16.mxu0 0
        %2089 = vmatmul.mubr.bf16.gmra.mrb[0].mxu0 %v2051
        %v2090 = vpop.f32.mrb[0].mxu0
        %v2091 = vadd.f32 0.0, %v2090
        %v2092 = vpop.f32.mrb[0].mxu0
        %v2093 = vpop.f32.mrb[0].mxu0
        %v2094 = vpop.f32.mrb[0].mxu0
        %2095 = vdwg.mxu0
        %2098 = vrot.lane.b32.xlu0 %v1861, 8
        %v2099 = vpop.permute.xlu0 %2098
        %2100 = vrot.lane.b32.xlu0 %v1907, 8
        %v2101 = vpop.permute.xlu0 %2100
        %2106 = vrot.lane.b32.xlu0 %v1953, 16
        %v2107 = vpop.permute.xlu0 %2106
        %2108 = vrot.lane.b32.xlu0 %v1999, 16
        %v2109 = vpop.permute.xlu0 %2108
        %2114 = vrot.lane.b32.xlu0 %v2045, 24
        %v2115 = vpop.permute.xlu0 %2114
        %2116 = vrot.lane.b32.xlu0 %v2091, 24
        %v2117 = vpop.permute.xlu0 %2116
        %v2120 = vsel %vm1234, %v1769, %v2099
        %v2121 = vsel %vm1234, %v1815, %v2101
        %vm2122 = vcmask 130048
        %v2123 = vsel %vm2122, %v2120, %v2107
        %v2124 = vsel %vm2122, %v2121, %v2109
        %vm2125 = vcmask 195584
        %v2126 = vsel %vm2125, %v2123, %v2115
        %v2127 = vsel %vm2125, %v2124, %v2117
        %v2128 = vpack.c.bf16 %v2127, %v2126
        %v2130 = vlaneseq
        %v2131 = vshrl.u32 %v2130, 7
        %v2132 = vsub.s32 0, %v2131
        %v2133 = vrot.slane %v979, %v2132
        %v2139 = vunpack.c.l.b16 %v975
        %v2140 = vunpack.c.l.b16 %v976
        %v2141 = vunpack.c.l.b16 %v977
        %v2142 = vunpack.c.l.b16 %v978
        %v2143 = vpack.c.b16 %v2140, %v2139
        %v2144 = vpack.c.b16 %v2142, %v2141
        %v2148 = vsel %vm1017, %v2128, 0
        %2150 = vmatprep.subr.bf16.mxu0 0
        %2151 = vmatpush1.bf16.msra.mxu0 %v2143
        %2152 = vmatprep.subr.bf16.mxu0 0
        %2153 = vmatpush1.bf16.msra.mxu0 %v2144
        %2154 = vmatprep.subr.bf16.mxu0 0
        %2155 = vmatpush1.bf16.msra.mxu0 0
        %2156 = vmatprep.subr.bf16.mxu0 0
        %2157 = vmatpush1.bf16.msra.mxu0 0
        %2158 = vmatprep.subr.bf16.mxu0 0
        %2159 = vmatpush1.bf16.msra.mxu0 0
        %2160 = vmatprep.subr.bf16.mxu0 0
        %2161 = vmatpush1.bf16.msra.mxu0 0
        %2162 = vmatprep.subr.bf16.mxu0 0
        %2163 = vmatpush1.bf16.msra.mxu0 0
        %2164 = vmatprep.subr.bf16.mxu0 0
        %2165 = vmatpush1.bf16.msra.mxu0 0
        %2166 = vmatprep.subr.bf16.mxu0 0
        %2167 = vmatpush1.bf16.msra.mxu0 0
        %2168 = vmatprep.subr.bf16.mxu0 0
        %2169 = vmatpush1.bf16.msra.mxu0 0
        %2170 = vmatprep.subr.bf16.mxu0 0
        %2171 = vmatpush1.bf16.msra.mxu0 0
        %2172 = vmatprep.subr.bf16.mxu0 0
        %2173 = vmatpush1.bf16.msra.mxu0 0
        %2174 = vmatprep.subr.bf16.mxu0 0
        %2175 = vmatpush1.bf16.msra.mxu0 0
        %2176 = vmatprep.subr.bf16.mxu0 0
        %2177 = vmatpush1.bf16.msra.mxu0 0
        %2178 = vmatprep.subr.bf16.mxu0 0
        %2179 = vmatpush1.bf16.msra.mxu0 0
        %2180 = vmatprep.subr.bf16.mxu0 0
        %2181 = vmatpush1.bf16.msra.mxu0 0
        %2182 = vmatprep.mubr.bf16.mxu0 0
        %2183 = vmatmul.mubr.bf16.gmra.mrb[0].mxu0 %v2148
        %v2184 = vpop.f32.mrb[0].mxu0
        %v2185 = vadd.f32 %v2133, %v2184
        %v2186 = vpop.f32.mrb[0].mxu0
        %v2187 = vpop.f32.mrb[0].mxu0
        %v2188 = vadd.f32 %v2133, %v2187
        %v2189 = vpop.f32.mrb[0].mxu0
        %2190 = vdwg.mxu0
        %v2191 = vadd.f32 %v958, %v2185
        %v2192 = vadd.f32 %v959, %v2188
        %v2193 = vsel %vm1017, %v2191, 0.0
        %2194 = vadd.xlane.f32.xlu0 %v2193
        %v2195 = vpop.xlane.xlu0 %2194
        %v2196 = vsel %vm1017, %v2192, 0.0
        %2197 = vadd.xlane.f32.xlu0 %v2196
        %v2198 = vpop.xlane.xlu0 %2197
        %v2199 = vrcp.pop 32.0
        %v2200 = vmul.f32 %v2195, %v2199
        %v2201 = vmul.f32 %v2198, %v2199
        %v2202 = vsub.f32 %v2191, %v2200
        %v2203 = vsub.f32 %v2192, %v2201
        %v2204 = vmul.f32 %v2202, %v2202
        %v2205 = vmul.f32 %v2203, %v2203
        %v2206 = vsel %vm1017, %v2204, 0.0
        %2207 = vadd.xlane.f32.xlu0 %v2206
        %v2208 = vpop.xlane.xlu0 %2207
        %v2209 = vsel %vm1017, %v2205, 0.0
        %2210 = vadd.xlane.f32.xlu0 %v2209
        %v2211 = vpop.xlane.xlu0 %2210
        %v2212 = vmul.f32 %v2208, %v2199
        %v2213 = vmul.f32 %v2211, %v2199
        %v2214 = vadd.f32 %v2212, 1e-05
        %v2215 = vadd.f32 %v2213, 1e-05
        %v2216 = vrsqrt.pop %v2214
        %v2217 = vrsqrt.pop %v2215
        %v2218 = vmul.f32 %v2202, %v2216
        %v2219 = vmul.f32 %v2203, %v2217
        %v2221 = vlaneseq
        %v2222 = vshrl.u32 %v2221, 7
        %v2223 = vsub.s32 0, %v2222
        %v2224 = vrot.slane %v980, %v2223
        %v2226 = vmul.f32 %v2218, %v2224
        %v2227 = vmul.f32 %v2219, %v2224
        %v2229 = vlaneseq
        %v2230 = vshrl.u32 %v2229, 7
        %v2231 = vsub.s32 0, %v2230
        %v2232 = vrot.slane %v981, %v2231
        %v2234 = vadd.f32 %v2226, %v2232
        %v2235 = vadd.f32 %v2227, %v2232
        %v2236 = vpack.c.bf16 %v2235, %v2234
        %v2238 = vlaneseq
        %v2239 = vshrl.u32 %v2238, 7
        %v2240 = vsub.s32 0, %v2239
        %v2241 = vrot.slane %v986, %v2240
        %v2247 = vunpack.c.l.b16 %v982
        %v2248 = vunpack.c.l.b16 %v983
        %v2249 = vunpack.c.l.b16 %v984
        %v2250 = vunpack.c.l.b16 %v985
        %v2251 = vpack.c.b16 %v2248, %v2247
        %v2252 = vpack.c.b16 %v2250, %v2249
        %v2256 = vsel %vm1017, %v2236, 0
        %2258 = vmatprep.subr.bf16.mxu0 0
        %2259 = vmatpush1.bf16.msra.mxu0 %v2251
        %2260 = vmatprep.subr.bf16.mxu0 0
        %2261 = vmatpush1.bf16.msra.mxu0 %v2252
        %2262 = vmatprep.subr.bf16.mxu0 0
        %2263 = vmatpush1.bf16.msra.mxu0 0
        %2264 = vmatprep.subr.bf16.mxu0 0
        %2265 = vmatpush1.bf16.msra.mxu0 0
        %2266 = vmatprep.subr.bf16.mxu0 0
        %2267 = vmatpush1.bf16.msra.mxu0 0
        %2268 = vmatprep.subr.bf16.mxu0 0
        %2269 = vmatpush1.bf16.msra.mxu0 0
        %2270 = vmatprep.subr.bf16.mxu0 0
        %2271 = vmatpush1.bf16.msra.mxu0 0
        %2272 = vmatprep.subr.bf16.mxu0 0
        %2273 = vmatpush1.bf16.msra.mxu0 0
        %2274 = vmatprep.subr.bf16.mxu0 0
        %2275 = vmatpush1.bf16.msra.mxu0 0
        %2276 = vmatprep.subr.bf16.mxu0 0
        %2277 = vmatpush1.bf16.msra.mxu0 0
        %2278 = vmatprep.subr.bf16.mxu0 0
        %2279 = vmatpush1.bf16.msra.mxu0 0
        %2280 = vmatprep.subr.bf16.mxu0 0
        %2281 = vmatpush1.bf16.msra.mxu0 0
        %2282 = vmatprep.subr.bf16.mxu0 0
        %2283 = vmatpush1.bf16.msra.mxu0 0
        %2284 = vmatprep.subr.bf16.mxu0 0
        %2285 = vmatpush1.bf16.msra.mxu0 0
        %2286 = vmatprep.subr.bf16.mxu0 0
        %2287 = vmatpush1.bf16.msra.mxu0 0
        %2288 = vmatprep.subr.bf16.mxu0 0
        %2289 = vmatpush1.bf16.msra.mxu0 0
        %2290 = vmatprep.mubr.bf16.mxu0 0
        %2291 = vmatmul.mubr.bf16.gmra.mrb[0].mxu0 %v2256
        %v2292 = vpop.f32.mrb[0].mxu0
        %v2293 = vadd.f32 %v2241, %v2292
        %v2294 = vpop.f32.mrb[0].mxu0
        %v2295 = vpop.f32.mrb[0].mxu0
        %v2296 = vadd.f32 %v2241, %v2295
        %v2297 = vpop.f32.mrb[0].mxu0
        %2298 = vdwg.mxu0
        %v2299 = vmax.f32 %v2293, 0.0
        %v2300 = vmax.f32 %v2296, 0.0
        %v2301 = vpack.c.bf16 %v2300, %v2299
        %v2303 = vlaneseq
        %v2304 = vshrl.u32 %v2303, 7
        %v2305 = vsub.s32 0, %v2304
        %v2306 = vrot.slane %v995, %v2305
        %v2316 = vunpack.c.l.b16 %v987
        %v2317 = vunpack.c.l.b16 %v988
        %v2318 = vunpack.c.l.b16 %v989
        %v2319 = vunpack.c.l.b16 %v990
        %v2320 = vunpack.c.l.b16 %v991
        %v2321 = vunpack.c.l.b16 %v992
        %v2322 = vunpack.c.l.b16 %v993
        %v2323 = vunpack.c.l.b16 %v994
        %v2324 = vpack.c.b16 %v2317, %v2316
        %v2325 = vpack.c.b16 %v2319, %v2318
        %v2326 = vpack.c.b16 %v2321, %v2320
        %v2327 = vpack.c.b16 %v2323, %v2322
        %vm2332 = vcmask 523264
        %v2334 = vsel %vm2332, %v2301, 0
        %2336 = vmatprep.subr.bf16.mxu0 0
        %2337 = vmatpush1.bf16.msra.mxu0 %v2324
        %2338 = vmatprep.subr.bf16.mxu0 0
        %2339 = vmatpush1.bf16.msra.mxu0 %v2325
        %2340 = vmatprep.subr.bf16.mxu0 0
        %2341 = vmatpush1.bf16.msra.mxu0 %v2326
        %2342 = vmatprep.subr.bf16.mxu0 0
        %2343 = vmatpush1.bf16.msra.mxu0 %v2327
        %2344 = vmatprep.subr.bf16.mxu0 0
        %2345 = vmatpush1.bf16.msra.mxu0 0
        %2346 = vmatprep.subr.bf16.mxu0 0
        %2347 = vmatpush1.bf16.msra.mxu0 0
        %2348 = vmatprep.subr.bf16.mxu0 0
        %2349 = vmatpush1.bf16.msra.mxu0 0
        %2350 = vmatprep.subr.bf16.mxu0 0
        %2351 = vmatpush1.bf16.msra.mxu0 0
        %2352 = vmatprep.subr.bf16.mxu0 0
        %2353 = vmatpush1.bf16.msra.mxu0 0
        %2354 = vmatprep.subr.bf16.mxu0 0
        %2355 = vmatpush1.bf16.msra.mxu0 0
        %2356 = vmatprep.subr.bf16.mxu0 0
        %2357 = vmatpush1.bf16.msra.mxu0 0
        %2358 = vmatprep.subr.bf16.mxu0 0
        %2359 = vmatpush1.bf16.msra.mxu0 0
        %2360 = vmatprep.subr.bf16.mxu0 0
        %2361 = vmatpush1.bf16.msra.mxu0 0
        %2362 = vmatprep.subr.bf16.mxu0 0
        %2363 = vmatpush1.bf16.msra.mxu0 0
        %2364 = vmatprep.subr.bf16.mxu0 0
        %2365 = vmatpush1.bf16.msra.mxu0 0
        %2366 = vmatprep.subr.bf16.mxu0 0
        %2367 = vmatpush1.bf16.msra.mxu0 0
        %2368 = vmatprep.mubr.bf16.mxu0 0
        %2369 = vmatmul.mubr.bf16.gmra.mrb[0].mxu0 %v2334
        %v2370 = vpop.f32.mrb[0].mxu0
        %v2371 = vadd.f32 %v2306, %v2370
        %v2372 = vpop.f32.mrb[0].mxu0
        %v2373 = vpop.f32.mrb[0].mxu0
        %v2374 = vadd.f32 %v2306, %v2373
        %v2375 = vpop.f32.mrb[0].mxu0
        %2376 = vdwg.mxu0
        %v2377 = vadd.f32 %v2234, %v2371
        %v2378 = vadd.f32 %v2235, %v2374
        %v2379 = vsel %vm1017, %v2377, 0.0
        %2380 = vadd.xlane.f32.xlu0 %v2379
        %v2381 = vpop.xlane.xlu0 %2380
        %v2382 = vsel %vm1017, %v2378, 0.0
        %2383 = vadd.xlane.f32.xlu0 %v2382
        %v2384 = vpop.xlane.xlu0 %2383
        %v2385 = vmul.f32 %v2381, %v2199
        %v2386 = vmul.f32 %v2384, %v2199
        %v2387 = vsub.f32 %v2377, %v2385
        %v2388 = vsub.f32 %v2378, %v2386
        %v2389 = vmul.f32 %v2387, %v2387
        %v2390 = vmul.f32 %v2388, %v2388
        %v2391 = vsel %vm1017, %v2389, 0.0
        %2392 = vadd.xlane.f32.xlu0 %v2391
        %v2393 = vpop.xlane.xlu0 %2392
        %v2394 = vsel %vm1017, %v2390, 0.0
        %2395 = vadd.xlane.f32.xlu0 %v2394
        %v2396 = vpop.xlane.xlu0 %2395
        %v2397 = vmul.f32 %v2393, %v2199
        %v2398 = vmul.f32 %v2396, %v2199
        %v2399 = vadd.f32 %v2397, 1e-05
        %v2400 = vadd.f32 %v2398, 1e-05
        %v2401 = vrsqrt.pop %v2399
        %v2402 = vrsqrt.pop %v2400
        %v2403 = vmul.f32 %v2387, %v2401
        %v2404 = vmul.f32 %v2388, %v2402
        %v2406 = vlaneseq
        %v2407 = vshrl.u32 %v2406, 7
        %v2408 = vsub.s32 0, %v2407
        %v2409 = vrot.slane %v996, %v2408
        %v2411 = vmul.f32 %v2403, %v2409
        %v2412 = vmul.f32 %v2404, %v2409
        %v2414 = vlaneseq
        %v2415 = vshrl.u32 %v2414, 7
        %v2416 = vsub.s32 0, %v2415
        %v2417 = vrot.slane %v997, %v2416
        %v2419 = vadd.f32 %v2411, %v2417
        %v2420 = vadd.f32 %v2412, %v2417
        %2421 = vst.msk [vmem:[#allocation2] sm:$0xff] %vm1017, %v2419
        %2422 = vst.msk [vmem:[#allocation2 + $0x8] sm:$0xff] %vm1017, %v2420
        %p2423 = scmp.eq.s32.totalorder %s38, 1
        // Predicated region
        $region117: #{tpu_custom_call.1} parent=95 // pred_check
          %p2424 = pneg %p2423
        $region118: #{tpu_custom_call.1} parent=95 // pred_check_branch
          %2426 = sbr.rel (%p2424) target = $region120
        $region119: #{tpu_custom_call.1} parent=95 // pred_region
          %2427 = vst.msk [vmem:[#allocation10] sm:$0xff] %vm1017, %v2419
          %2428 = vst.msk [vmem:[#allocation10 + $0x8] sm:$0xff] %vm1017, %v2420
        $region120: #{tpu_custom_call.1} parent=95 // pred_fallthru
          _
        // Predicated region
        $region121: #{tpu_custom_call.1} parent=95 // pred_check
          %p2429 = pneg %p552
        $region122: #{tpu_custom_call.1} parent=95 // pred_check_branch
          %2431 = sbr.rel (%p2429) target = $region124
        $region123: #{tpu_custom_call.1} parent=95 // pred_region
          %s2432 = smul.u32 2, %s37
          %s2434 = ssub.s32 256, 256
          %2435 = vsyncadd [#allocation5], %s2434
          %s2436 = smul.addr %s2432, 128
          %s2437 = scalar_lea.hbm %s19, %s2436
          %s2438 = sshll.u32 [#allocation10], 4
          %s2439 = int_to_ptr.vmem [resolvable:$true] %s2438
          %2444 = dma.vmem_to_hbm [thread:$0]  %s2439, 256, %s2437, [#allocation5], 128, 128, 8
        $region124: #{tpu_custom_call.1} parent=95 // pred_fallthru
          _
        // Predicated region
        $region125: #{tpu_custom_call.1} parent=95 // pred_check
          %p2445 = pneg %p552
        $region126: #{tpu_custom_call.1} parent=95 // pred_check_branch
          %2447 = sbr.rel (%p2445) target = $region128
        $region127: #{tpu_custom_call.1} parent=95 // pred_region
          %2448 = dma.done [#allocation5], 256
        $region128: #{tpu_custom_call.1} parent=95 // pred_fallthru
          _
      $region96: #{tpu_custom_call.1} parent=5 // pred_fallthru
        _
      %p2449 = scmp.le.s32.totalorder 2, %s28
      // Predicated region
      $region129: #{tpu_custom_call.1} parent=5 // pred_check
        %p2450 = pneg %p2449
      $region130: #{tpu_custom_call.1} parent=5 // pred_check_branch
        %2452 = sbr.rel (%p2450) target = $region132
      $region131: #{tpu_custom_call.1} parent=5 // pred_region
        %s2453 = ssub.s32 %s28, 2
      $region132: #{tpu_custom_call.1} parent=5 // pred_fallthru
        _
    $region6: #{tpu_custom_call.1} parent=1 // loop_footer
      %s32 = sadd.s32 1, %s28
    $region7: #{tpu_custom_call.1} parent=1 // loop_footer_branch
      %27 = sbr.rel target = $region3
    $region8: #{tpu_custom_call.1} parent=1 // loop_exit
      _
    %2454 = vsyncpa [#allocation4], 1
    %s2455 = scalar_lea.sflag [#allocation4], 1
    %2456 = vsyncpa %s2455, 1
    %2457 = vsyncpa [#allocation7], 1
    %2458 = vsyncpa [#allocation5], 1
    %s2459 = scalar_lea.sflag [#allocation5], 1
    %2460 = vsyncpa %s2459, 1

</llo_original>
